<compile_context>
chip_gen: v7x
topology: tpu7x:2x2x1
jax: 0.10.0
libtpu: 0.0.40
codegen_flags: <defaults>
</compile_context>

<pallas_src>
import jax
import jax.numpy as jnp
from jax.experimental import pallas as pl
from jax.experimental.pallas import tpu as pltpu

_LANE = 128
_SUBLANE = 8


def _round_up(x, m):
    return (x + m - 1) // m * m


def _pad_to(x, axis, target):
    pad = target - x.shape[axis]
    if pad <= 0:
        return x
    cfg = [(0, 0)] * x.ndim
    cfg[axis] = (0, pad)
    return jnp.pad(x, cfg)


def _pick_batch_block(batch, hw, target_rows=256, min_rows=128):
    """Images per grid step: fill the MXU (>= target_rows rows per dot) but keep
    >=2 grid steps (v7x megacore) whenever that still leaves >= min_rows rows."""
    b_blk = max(1, min(batch, -(-target_rows // hw)))
    while batch % b_blk:
        b_blk -= 1
    if batch // b_blk < 2 and batch % 2 == 0 and (batch // 2) * hw >= min_rows:
        b_blk = batch // 2
    return b_blk


# ----------------------------------------------------------------------------
# Fused kernel: backbone conv + head conv (row-grouped taps) + GAP + FC + softmax
# One grid step == b_blk batch elements.
# ----------------------------------------------------------------------------
def _make_fused_kernel(b_blk, ho, wo, c_bb, c_head, class_num, ncls_pad, k_bb_pad):
    hw = ho * wo
    rows = b_blk * hw
    kg = 3 * c_bb                     # K of one row-grouped head dot (3 taps x 32)

    def kernel(patch_ref, wbb_ref, bbb_ref, whead_ref, bhead_ref,
               wfc_ref, bfc_ref, score_ref, pred_ref, pad_scr):
        # ---- backbone 3x3/s2 conv: one im2col matmul over the whole block ----
        p = patch_ref[...].reshape(rows, k_bb_pad)                    # bf16
        acc = jnp.dot(p, wbb_ref[...], preferred_element_type=jnp.float32)
        h_bb = jnp.maximum(acc + bbb_ref[...], 0.0)                   # (rows, 32) f32

        # ---- stage the activation in a zero-haloed VMEM scratch ---------------
        # Re-zeroed every step: init-once at program_id==0 is unsafe if the batch
        # axis is megacore-split across TensorCores (per-core scratch).  ~40 KB.
        pad_scr[...] = jnp.zeros_like(pad_scr)
        pad_scr[:, 1:ho + 1, 1:wo + 1, :] = h_bb.reshape(b_blk, ho, wo, c_bb)

        # ---- head 3x3/s1 conv: 3 column-shifted slabs -> 3 dots of K=96 -------
        # Only 3 unaligned sublane slices (dj), each reused across the 3 row taps.
        slabs = [pad_scr[:, :, dj:dj + wo, :] for dj in range(3)]     # (b,ho+2,wo,32) f32
        cat = jnp.concatenate(slabs, axis=-1).astype(jnp.bfloat16)    # (b,ho+2,wo,96) bf16

        acc_h = jnp.broadcast_to(bhead_ref[...], (rows, c_head))      # bias-init (f32)
        for di in range(3):                       # row taps: cheap outer-dim slices
            grp = cat[:, di:di + ho].reshape(rows, kg)
            acc_h = acc_h + jnp.dot(grp, whead_ref[di],
                                    preferred_element_type=jnp.float32)
        h = jnp.maximum(acc_h, 0.0)                                   # (rows, 256) f32

        # ---- GAP (1/(ho*wo) folded into wfc) + FC -> logits --------------------
        pooled = jnp.sum(h.reshape(b_blk, hw, c_head), axis=1)        # (b_blk, 256)
        logits = jnp.dot(pooled.astype(jnp.bfloat16), wfc_ref[...],
                         preferred_element_type=jnp.float32) + bfc_ref[...]

        # ---- post_process: softmax max-prob + argmax ---------------------------
        lane = jax.lax.broadcasted_iota(jnp.int32, logits.shape, 1)
        lg = jnp.where(lane < class_num, logits, jnp.float32(-1e30))
        m = jnp.max(lg, axis=1, keepdims=True)
        denom = jnp.sum(jnp.exp(lg - m), axis=1, keepdims=True)
        score = pl.reciprocal(denom, approx=True)          # max softmax prob = 1/denom
        pred = jnp.min(jnp.where(lg == m, lane, ncls_pad), axis=1, keepdims=True)

        score_ref[...] = jnp.broadcast_to(score.reshape(b_blk, 1, 1), score_ref.shape)
        pred_ref[...] = jnp.broadcast_to(pred.reshape(b_blk, 1, 1), pred_ref.shape)

    return kernel


# ----------------------------------------------------------------------------
# Forward (eval / post_process path of ClassificationNet)
# ----------------------------------------------------------------------------
@jax.jit
def classification_net_forward(params, x_nchw):
    # NCHW (PyTorch convention) -> NHWC
    x = jnp.transpose(x_nchw, (0, 2, 3, 1)).astype(jnp.float32)
    B, H, W, cin = x.shape

    kh, kw, _, c_bb = params["bb_w"].shape
    c_head = params["head_w"].shape[-1]
    class_num = params["fc_w"].shape[-1]

    stride, pad = 2, 1
    ho = (H + 2 * pad - kh) // stride + 1
    wo = (W + 2 * pad - kw) // stride + 1
    hw = ho * wo

    assert kh == 3 and kw == 3, "kernel assumes 3x3 convs"
    assert wo % _SUBLANE == 0 and hw % _SUBLANE == 0, (
        "kernel assumes the conv output width / area are multiples of 8 (sublane)")
    assert class_num <= _LANE

    b_blk = _pick_batch_block(B, hw)
    assert B % b_blk == 0 and (b_blk * hw) % _SUBLANE == 0

    # tiny backbone im2col stays in XLA (raw 3-channel image, a few KB, bf16);
    # the heavy head-conv patches are built in-kernel and never leave VMEM.
    k_bb = kh * kw * cin
    k_bb_pad = _round_up(k_bb, _LANE)
    ncls_pad = _round_up(class_num, _LANE)

    xp = jnp.pad(x, ((0, 0), (pad, pad), (pad, pad), (0, 0))).astype(jnp.bfloat16)
    cols = [xp[:, i:i + stride * ho:stride, j:j + stride * wo:stride, :]
            for i in range(kh) for j in range(kw)]
    patches = jnp.concatenate(cols, axis=-1).reshape(B, hw, k_bb)
    patches = _pad_to(patches, 2, k_bb_pad)                          # bf16 (B, hw, 128)

    w_bb = _pad_to(params["bb_w"].reshape(k_bb, c_bb), 0, k_bb_pad).astype(jnp.bfloat16)
    b_bb = params["bb_b"].reshape(1, c_bb).astype(jnp.float32)
    # head weights grouped by kernel row: (3, kw*cin, cout) = (3, 96, 256)
    w_head = params["head_w"].reshape(kh, kw * c_bb, c_head).astype(jnp.bfloat16)
    b_head = params["head_b"].reshape(1, c_head).astype(jnp.float32)
    # fold GAP 1/(ho*wo) into the FC weight; bf16 operands (MXU-native on v5e)
    w_fc = (_pad_to(params["fc_w"], 1, ncls_pad) / jnp.float32(hw)).astype(jnp.bfloat16)
    b_fc = _pad_to(params["fc_b"].reshape(1, class_num), 1, ncls_pad).astype(jnp.float32)

    kernel = _make_fused_kernel(b_blk, ho, wo, c_bb, c_head, class_num,
                                ncls_pad, k_bb_pad)

    score, pred = pl.pallas_call(
        kernel,
        out_shape=(
            jax.ShapeDtypeStruct((B, 1, _LANE), jnp.float32),
            jax.ShapeDtypeStruct((B, 1, _LANE), jnp.int32),
        ),
        grid=(B // b_blk,),
        in_specs=[
            pl.BlockSpec((b_blk, hw, k_bb_pad), lambda g: (g, 0, 0)),    # im2col patches
            pl.BlockSpec((k_bb_pad, c_bb), lambda g: (0, 0)),            # backbone W
            pl.BlockSpec((1, c_bb), lambda g: (0, 0)),                   # backbone b
            pl.BlockSpec((kh, kw * c_bb, c_head), lambda g: (0, 0, 0)),  # head W (row groups)
            pl.BlockSpec((1, c_head), lambda g: (0, 0)),                 # head b
            pl.BlockSpec((c_head, ncls_pad), lambda g: (0, 0)),          # fc W (GAP-scaled)
            pl.BlockSpec((1, ncls_pad), lambda g: (0, 0)),               # fc b
        ],
        out_specs=(
            pl.BlockSpec((b_blk, 1, _LANE), lambda g: (g, 0, 0)),        # score (lane-dense)
            pl.BlockSpec((b_blk, 1, _LANE), lambda g: (g, 0, 0)),        # pred  (lane-dense)
        ),
        scratch_shapes=[pltpu.VMEM((b_blk, ho + 2, wo + 2, c_bb), jnp.float32)],
        compiler_params=pltpu.CompilerParams(
            dimension_semantics=("parallel",)),
    )(patches, w_bb, b_bb, w_head, b_head, w_fc, b_fc)

    return {"score": score[:, 0, 0], "pred": pred[:, 0, 0]}


# ----------------------------------------------------------------------------
# Deterministic parameter init + pure-JAX reference (for the self-check)
# ----------------------------------------------------------------------------
def init_params(key, in_ch=3, backbone_ch=32, head_ch=256, class_num=10):
    k1, k2, k3 = jax.random.split(key, 3)

    def conv_w(k, kh, kw, cin, cout):
        fan_in = kh * kw * cin
        return (jax.random.normal(k, (kh, kw, cin, cout), jnp.float32)
                / jnp.sqrt(jnp.float32(fan_in)))

    return {
        "bb_w": conv_w(k1, 3, 3, in_ch, backbone_ch),
        "bb_b": jnp.zeros((backbone_ch,), jnp.float32),
        "head_w": conv_w(k2, 3, 3, backbone_ch, head_ch),
        "head_b": jnp.zeros((head_ch,), jnp.float32),
        "fc_w": (jax.random.normal(k3, (head_ch, class_num), jnp.float32)
                 / jnp.sqrt(jnp.float32(head_ch))),
        "fc_b": jnp.zeros((class_num,), jnp.float32),
    }


def _reference_forward(params, x_nchw):
    x = jnp.transpose(x_nchw, (0, 2, 3, 1)).astype(jnp.float32)
    dn = ("NHWC", "HWIO", "NHWC")
    y = jax.lax.conv_general_dilated(x, params["bb_w"], (2, 2), ((1, 1), (1, 1)),
                                     dimension_numbers=dn)
    y = jax.nn.relu(y + params["bb_b"])
    y = jax.lax.conv_general_dilated(y, params["head_w"], (1, 1), ((1, 1), (1, 1)),
                                     dimension_numbers=dn)
    y = jax.nn.relu(y + params["head_b"])
    logits = jnp.mean(y, axis=(1, 2)) @ params["fc_w"] + params["fc_b"]
    probs = jax.nn.softmax(logits, axis=1)
    return jnp.max(probs, axis=1), jnp.argmax(probs, axis=1).astype(jnp.int32), probs


if __name__ == "__main__":
    key = jax.random.PRNGKey(0)
    pkey, xkey = jax.random.split(key)

    class_num = 10
    params = init_params(pkey, in_ch=3, backbone_ch=32, head_ch=256,
                         class_num=class_num)

    # inputs['data'] : NCHW image batch
    x = jax.random.normal(xkey, (2, 3, 16, 16), jnp.float32)

    out = classification_net_forward(params, x)
    jax.block_until_ready(out)

    assert out["score"].shape == (2,) and out["pred"].shape == (2,)
    assert out["pred"].dtype == jnp.int32

    # numerical sanity check vs. a pure-JAX f32 reference (kernel uses bf16 operands)
    ref_score, ref_pred, ref_probs = _reference_forward(params, x)
    assert bool(jnp.allclose(out["score"], ref_score, atol=5e-2, rtol=5e-2)), (
        out["score"], ref_score)
    srt = jnp.sort(ref_probs, axis=1)
    confident = (srt[:, -1] - srt[:, -2]) > 5e-2   # skip pred check on near-ties
    assert bool(jnp.all(jnp.where(confident, out["pred"] == ref_pred, True)))

    print("KERNEL_OK")
</pallas_src>

<mosaic_0001>
module attributes {stable_mosaic.version = 11 : i64} {
  func.func @kernel(%arg0: i32, %arg1: memref<2x64x128xbf16, #tpu.memory_space<vmem>>, %arg2: memref<128x32xbf16, #tpu.memory_space<vmem>>, %arg3: memref<1x32xf32, #tpu.memory_space<vmem>>, %arg4: memref<3x96x256xbf16, #tpu.memory_space<vmem>>, %arg5: memref<1x256xf32, #tpu.memory_space<vmem>>, %arg6: memref<256x128xbf16, #tpu.memory_space<vmem>>, %arg7: memref<1x128xf32, #tpu.memory_space<vmem>>, %arg8: memref<2x1x128xf32, #tpu.memory_space<vmem>>, %arg9: memref<2x1x128xi32, #tpu.memory_space<vmem>>, %arg10: memref<2x10x10x32xf32, #tpu.memory_space<vmem>>) attributes {dimension_semantics = [#tpu.dimension_semantics<parallel>], iteration_bounds = array<i64: 1>, scalar_prefetch = 0 : i64, scratch_operands = 1 : i64, tpu.core_type = #tpu.core_type<tc>, window_params = [{transform_indices = @transform_0, window_bounds = array<i64: 2, 64, 128>}, {pipeline_mode = #tpu.pipeline_mode<synchronous>, transform_indices = @transform_1, window_bounds = array<i64: 128, 32>}, {pipeline_mode = #tpu.pipeline_mode<synchronous>, transform_indices = @transform_2, window_bounds = array<i64: 1, 32>}, {pipeline_mode = #tpu.pipeline_mode<synchronous>, transform_indices = @transform_3, window_bounds = array<i64: 3, 96, 256>}, {pipeline_mode = #tpu.pipeline_mode<synchronous>, transform_indices = @transform_4, window_bounds = array<i64: 1, 256>}, {pipeline_mode = #tpu.pipeline_mode<synchronous>, transform_indices = @transform_5, window_bounds = array<i64: 256, 128>}, {pipeline_mode = #tpu.pipeline_mode<synchronous>, transform_indices = @transform_6, window_bounds = array<i64: 1, 128>}, {transform_indices = @transform_7, window_bounds = array<i64: 2, 1, 128>}, {transform_indices = @transform_8, window_bounds = array<i64: 2, 1, 128>}]} {
    %c0 = arith.constant 0 : index
    %c0_0 = arith.constant 0 : index
    %c0_1 = arith.constant 0 : index
    %0 = vector.load %arg1[%c0, %c0_0, %c0_1] : memref<2x64x128xbf16, #tpu.memory_space<vmem>>, vector<2x64x128xbf16>
    %1 = vector.shape_cast %0 : vector<2x64x128xbf16> to vector<128x128xbf16>
    %c0_2 = arith.constant 0 : index
    %c0_3 = arith.constant 0 : index
    %2 = vector.load %arg2[%c0_2, %c0_3] : memref<128x32xbf16, #tpu.memory_space<vmem>>, vector<128x32xbf16>
    %cst = arith.constant dense<0.000000e+00> : vector<128x32xf32>
    %3 = tpu.matmul %1, %2, %cst {dimension_numbers = #tpu.dot_dimension_numbers<[1], [0], [0], [1], [0, 0, 1, 1], [], []>} : vector<128x128xbf16>, vector<128x32xbf16>, vector<128x32xf32> -> vector<128x32xf32>
    %c0_4 = arith.constant 0 : index
    %c0_5 = arith.constant 0 : index
    %4 = vector.load %arg3[%c0_4, %c0_5] : memref<1x32xf32, #tpu.memory_space<vmem>>, vector<1x32xf32>
    %5 = vector.broadcast %4 : vector<1x32xf32> to vector<128x32xf32>
    %6 = arith.addf %3, %5 : vector<128x32xf32>
    %cst_6 = arith.constant 0.000000e+00 : f32
    %7 = vector.broadcast %cst_6 : f32 to vector<128x32xf32>
    %8 = arith.maximumf %6, %7 : vector<128x32xf32>
    %cst_7 = arith.constant 0.000000e+00 : f32
    %9 = vector.broadcast %cst_7 : f32 to vector<2x10x10x32xf32>
    %c0_8 = arith.constant 0 : index
    %c0_9 = arith.constant 0 : index
    %c0_10 = arith.constant 0 : index
    %c0_11 = arith.constant 0 : index
    %10 = vector.load %arg10[%c0_8, %c0_9, %c0_10, %c0_11] : memref<2x10x10x32xf32, #tpu.memory_space<vmem>>, vector<2x10x10x32xf32>
    tpu.vector_store %arg10[%c0_8, %c0_9, %c0_10, %c0_11], %9 {strides = array<i32>} : memref<2x10x10x32xf32, #tpu.memory_space<vmem>>, vector<2x10x10x32xf32>,
    %11 = vector.shape_cast %8 : vector<128x32xf32> to vector<2x8x8x32xf32>
    %c0_12 = arith.constant 0 : index
    %c1 = arith.constant 1 : index
    %c1_13 = arith.constant 1 : index
    %c0_14 = arith.constant 0 : index
    %12 = vector.load %arg10[%c0_12, %c1, %c1_13, %c0_14] : memref<2x10x10x32xf32, #tpu.memory_space<vmem>>, vector<2x8x8x32xf32>
    tpu.vector_store %arg10[%c0_12, %c1, %c1_13, %c0_14], %11 {strides = array<i32>} : memref<2x10x10x32xf32, #tpu.memory_space<vmem>>, vector<2x8x8x32xf32>,
    %c0_15 = arith.constant 0 : index
    %c0_16 = arith.constant 0 : index
    %c0_17 = arith.constant 0 : index
    %c0_18 = arith.constant 0 : index
    %13 = vector.load %arg10[%c0_15, %c0_16, %c0_17, %c0_18] : memref<2x10x10x32xf32, #tpu.memory_space<vmem>>, vector<2x10x8x32xf32>
    %c0_19 = arith.constant 0 : index
    %c0_20 = arith.constant 0 : index
    %c1_21 = arith.constant 1 : index
    %c0_22 = arith.constant 0 : index
    %14 = vector.load %arg10[%c0_19, %c0_20, %c1_21, %c0_22] : memref<2x10x10x32xf32, #tpu.memory_space<vmem>>, vector<2x10x8x32xf32>
    %c0_23 = arith.constant 0 : index
    %c0_24 = arith.constant 0 : index
    %c2 = arith.constant 2 : index
    %c0_25 = arith.constant 0 : index
    %15 = vector.load %arg10[%c0_23, %c0_24, %c2, %c0_25] : memref<2x10x10x32xf32, #tpu.memory_space<vmem>>, vector<2x10x8x32xf32>
    %16 = tpu.concatenate %13, %14, %15 in 3 : vector<2x10x8x32xf32>, vector<2x10x8x32xf32>, vector<2x10x8x32xf32> -> vector<2x10x8x96xf32>
    %17 = arith.truncf %16 : vector<2x10x8x96xf32> to vector<2x10x8x96xbf16>
    %c0_26 = arith.constant 0 : index
    %c0_27 = arith.constant 0 : index
    %18 = vector.load %arg5[%c0_26, %c0_27] : memref<1x256xf32, #tpu.memory_space<vmem>>, vector<1x256xf32>
    %19 = vector.shape_cast %18 : vector<1x256xf32> to vector<1x256xf32>
    %20 = vector.broadcast %19 : vector<1x256xf32> to vector<128x256xf32>
    %21 = vector.extract_strided_slice %17 {offsets = [0, 0, 0, 0], sizes = [2, 8, 8, 96], strides = [1, 1, 1, 1]} : vector<2x10x8x96xbf16> to vector<2x8x8x96xbf16>
    %22 = vector.shape_cast %21 : vector<2x8x8x96xbf16> to vector<128x96xbf16>
    %c0_28 = arith.constant 0 : index
    %c0_29 = arith.constant 0 : index
    %c0_30 = arith.constant 0 : index
    %23 = vector.load %arg4[%c0_28, %c0_29, %c0_30] : memref<3x96x256xbf16, #tpu.memory_space<vmem>>, vector<1x96x256xbf16>
    %24 = vector.shape_cast %23 : vector<1x96x256xbf16> to vector<96x256xbf16>
    %cst_31 = arith.constant dense<0.000000e+00> : vector<128x256xf32>
    %25 = tpu.matmul %22, %24, %cst_31 {dimension_numbers = #tpu.dot_dimension_numbers<[1], [0], [0], [1], [0, 0, 1, 1], [], []>} : vector<128x96xbf16>, vector<96x256xbf16>, vector<128x256xf32> -> vector<128x256xf32>
    %26 = arith.addf %20, %25 : vector<128x256xf32>
    %27 = vector.extract_strided_slice %17 {offsets = [0, 1, 0, 0], sizes = [2, 8, 8, 96], strides = [1, 1, 1, 1]} : vector<2x10x8x96xbf16> to vector<2x8x8x96xbf16>
    %28 = vector.shape_cast %27 : vector<2x8x8x96xbf16> to vector<128x96xbf16>
    %c1_32 = arith.constant 1 : index
    %c0_33 = arith.constant 0 : index
    %c0_34 = arith.constant 0 : index
    %29 = vector.load %arg4[%c1_32, %c0_33, %c0_34] : memref<3x96x256xbf16, #tpu.memory_space<vmem>>, vector<1x96x256xbf16>
    %30 = vector.shape_cast %29 : vector<1x96x256xbf16> to vector<96x256xbf16>
    %cst_35 = arith.constant dense<0.000000e+00> : vector<128x256xf32>
    %31 = tpu.matmul %28, %30, %cst_35 {dimension_numbers = #tpu.dot_dimension_numbers<[1], [0], [0], [1], [0, 0, 1, 1], [], []>} : vector<128x96xbf16>, vector<96x256xbf16>, vector<128x256xf32> -> vector<128x256xf32>
    %32 = arith.addf %26, %31 : vector<128x256xf32>
    %33 = vector.extract_strided_slice %17 {offsets = [0, 2, 0, 0], sizes = [2, 8, 8, 96], strides = [1, 1, 1, 1]} : vector<2x10x8x96xbf16> to vector<2x8x8x96xbf16>
    %34 = vector.shape_cast %33 : vector<2x8x8x96xbf16> to vector<128x96xbf16>
    %c2_36 = arith.constant 2 : index
    %c0_37 = arith.constant 0 : index
    %c0_38 = arith.constant 0 : index
    %35 = vector.load %arg4[%c2_36, %c0_37, %c0_38] : memref<3x96x256xbf16, #tpu.memory_space<vmem>>, vector<1x96x256xbf16>
    %36 = vector.shape_cast %35 : vector<1x96x256xbf16> to vector<96x256xbf16>
    %cst_39 = arith.constant dense<0.000000e+00> : vector<128x256xf32>
    %37 = tpu.matmul %34, %36, %cst_39 {dimension_numbers = #tpu.dot_dimension_numbers<[1], [0], [0], [1], [0, 0, 1, 1], [], []>} : vector<128x96xbf16>, vector<96x256xbf16>, vector<128x256xf32> -> vector<128x256xf32>
    %38 = arith.addf %32, %37 : vector<128x256xf32>
    %cst_40 = arith.constant 0.000000e+00 : f32
    %39 = vector.broadcast %cst_40 : f32 to vector<128x256xf32>
    %40 = arith.maximumf %38, %39 : vector<128x256xf32>
    %41 = vector.shape_cast %40 : vector<128x256xf32> to vector<2x64x256xf32>
    %cst_41 = arith.constant dense<0.000000e+00> : vector<2x256xf32>
    %42 = vector.multi_reduction <add>, %41, %cst_41 [1] : vector<2x64x256xf32> to vector<2x256xf32>
    %43 = arith.truncf %42 : vector<2x256xf32> to vector<2x256xbf16>
    %c0_42 = arith.constant 0 : index
    %c0_43 = arith.constant 0 : index
    %44 = vector.load %arg6[%c0_42, %c0_43] : memref<256x128xbf16, #tpu.memory_space<vmem>>, vector<256x128xbf16>
    %cst_44 = arith.constant dense<0.000000e+00> : vector<2x128xf32>
    %45 = tpu.matmul %43, %44, %cst_44 {dimension_numbers = #tpu.dot_dimension_numbers<[1], [0], [0], [1], [0, 0, 1, 1], [], []>} : vector<2x256xbf16>, vector<256x128xbf16>, vector<2x128xf32> -> vector<2x128xf32>
    %c0_45 = arith.constant 0 : index
    %c0_46 = arith.constant 0 : index
    %46 = vector.load %arg7[%c0_45, %c0_46] : memref<1x128xf32, #tpu.memory_space<vmem>>, vector<1x128xf32>
    %47 = vector.broadcast %46 : vector<1x128xf32> to vector<2x128xf32>
    %48 = arith.addf %45, %47 : vector<2x128xf32>
    %49 = tpu.iota {dimensions = array<i32: 1>} : vector<2x128xi32>
    %c10_i32 = arith.constant 10 : i32
    %50 = vector.broadcast %c10_i32 : i32 to vector<2x128xi32>
    %51 = arith.cmpi slt, %49, %50 : vector<2x128xi32>
    %cst_47 = arith.constant -1.000000e+30 : f32
    %52 = vector.broadcast %cst_47 : f32 to vector<2x128xf32>
    %53 = arith.select %51, %48, %52 : vector<2x128xi1>, vector<2x128xf32>
    %cst_48 = arith.constant dense<0xFF800000> : vector<2xf32>
    %54 = vector.multi_reduction <maximumf>, %53, %cst_48 [1] : vector<2x128xf32> to vector<2xf32>
    %55 = vector.shape_cast %54 : vector<2xf32> to vector<2x1xf32>
    %56 = vector.broadcast %55 : vector<2x1xf32> to vector<2x128xf32>
    %57 = arith.subf %53, %56 : vector<2x128xf32>
    %58 = math.exp %57 : vector<2x128xf32>
    %cst_49 = arith.constant dense<0.000000e+00> : vector<2xf32>
    %59 = vector.multi_reduction <add>, %58, %cst_49 [1] : vector<2x128xf32> to vector<2xf32>
    %60 = vector.shape_cast %59 : vector<2xf32> to vector<2x1xf32>
    %61 = tpu.reciprocal %60 {approx = true} : vector<2x1xf32> -> vector<2x1xf32>
    %62 = vector.broadcast %55 : vector<2x1xf32> to vector<2x128xf32>
    %63 = arith.cmpf oeq, %53, %62 : vector<2x128xf32>
    %c128_i32 = arith.constant 128 : i32
    %64 = vector.broadcast %c128_i32 : i32 to vector<2x128xi32>
    %65 = arith.select %63, %49, %64 : vector<2x128xi1>, vector<2x128xi32>
    %cst_50 = arith.constant dense<2147483647> : vector<2xi32>
    %66 = vector.multi_reduction <minsi>, %65, %cst_50 [1] : vector<2x128xi32> to vector<2xi32>
    %67 = vector.shape_cast %66 : vector<2xi32> to vector<2x1xi32>
    %68 = vector.shape_cast %61 : vector<2x1xf32> to vector<2x1x1xf32>
    %69 = vector.shape_cast %68 : vector<2x1x1xf32> to vector<2x1x1xf32>
    %70 = vector.broadcast %69 : vector<2x1x1xf32> to vector<2x1x128xf32>
    %c0_51 = arith.constant 0 : index
    %c0_52 = arith.constant 0 : index
    %c0_53 = arith.constant 0 : index
    %71 = vector.load %arg8[%c0_51, %c0_52, %c0_53] : memref<2x1x128xf32, #tpu.memory_space<vmem>>, vector<2x1x128xf32>
    tpu.vector_store %arg8[%c0_51, %c0_52, %c0_53], %70 {strides = array<i32>} : memref<2x1x128xf32, #tpu.memory_space<vmem>>, vector<2x1x128xf32>,
    %72 = vector.shape_cast %67 : vector<2x1xi32> to vector<2x1x1xi32>
    %73 = vector.shape_cast %72 : vector<2x1x1xi32> to vector<2x1x1xi32>
    %74 = vector.broadcast %73 : vector<2x1x1xi32> to vector<2x1x128xi32>
    %c0_54 = arith.constant 0 : index
    %c0_55 = arith.constant 0 : index
    %c0_56 = arith.constant 0 : index
    %75 = vector.load %arg9[%c0_54, %c0_55, %c0_56] : memref<2x1x128xi32, #tpu.memory_space<vmem>>, vector<2x1x128xi32>
    tpu.vector_store %arg9[%c0_54, %c0_55, %c0_56], %74 {strides = array<i32>} : memref<2x1x128xi32, #tpu.memory_space<vmem>>, vector<2x1x128xi32>,
    return
  }
  func.func @transform_0(%arg0: i32) -> (i32, i32, i32) {
    %c0_i32 = arith.constant 0 : i32
    %c0_i32_0 = arith.constant 0 : i32
    %c0_i32_1 = arith.constant 0 : i32
    return %arg0, %c0_i32, %c0_i32_0 : i32, i32, i32
  }
  func.func @transform_1(%arg0: i32) -> (i32, i32) {
    %c0_i32 = arith.constant 0 : i32
    %c0_i32_0 = arith.constant 0 : i32
    %c0_i32_1 = arith.constant 0 : i32
    return %c0_i32, %c0_i32_0 : i32, i32
  }
  func.func @transform_2(%arg0: i32) -> (i32, i32) {
    %c0_i32 = arith.constant 0 : i32
    %c0_i32_0 = arith.constant 0 : i32
    %c0_i32_1 = arith.constant 0 : i32
    return %c0_i32, %c0_i32_0 : i32, i32
  }
  func.func @transform_3(%arg0: i32) -> (i32, i32, i32) {
    %c0_i32 = arith.constant 0 : i32
    %c0_i32_0 = arith.constant 0 : i32
    %c0_i32_1 = arith.constant 0 : i32
    %c0_i32_2 = arith.constant 0 : i32
    return %c0_i32, %c0_i32_0, %c0_i32_1 : i32, i32, i32
  }
  func.func @transform_4(%arg0: i32) -> (i32, i32) {
    %c0_i32 = arith.constant 0 : i32
    %c0_i32_0 = arith.constant 0 : i32
    %c0_i32_1 = arith.constant 0 : i32
    return %c0_i32, %c0_i32_0 : i32, i32
  }
  func.func @transform_5(%arg0: i32) -> (i32, i32) {
    %c0_i32 = arith.constant 0 : i32
    %c0_i32_0 = arith.constant 0 : i32
    %c0_i32_1 = arith.constant 0 : i32
    return %c0_i32, %c0_i32_0 : i32, i32
  }
  func.func @transform_6(%arg0: i32) -> (i32, i32) {
    %c0_i32 = arith.constant 0 : i32
    %c0_i32_0 = arith.constant 0 : i32
    %c0_i32_1 = arith.constant 0 : i32
    return %c0_i32, %c0_i32_0 : i32, i32
  }
  func.func @transform_7(%arg0: i32) -> (i32, i32, i32) {
    %c0_i32 = arith.constant 0 : i32
    %c0_i32_0 = arith.constant 0 : i32
    %c0_i32_1 = arith.constant 0 : i32
    return %arg0, %c0_i32, %c0_i32_0 : i32, i32, i32
  }
  func.func @transform_8(%arg0: i32) -> (i32, i32, i32) {
    %c0_i32 = arith.constant 0 : i32
    %c0_i32_0 = arith.constant 0 : i32
    %c0_i32_1 = arith.constant 0 : i32
    return %arg0, %c0_i32, %c0_i32_0 : i32, i32, i32
  }
}

</mosaic_0001>

<llo_original>
// kernel: classification_net_forward.1
$region0: #{classification_net_forward.1}
  #allocation0 [shape = 'u32[]', space=smem, size = 0x4, offset = 0x4, fixed_abs, tag = 'smem constant byte address 0x4 - core index']
  #allocation1 [shape = 'u32[144,128]{1,0:T(1,128)}', space=vmem, size = 0x12000, scoped, tag = 'internal scratch']
  #allocation2 [shape = 'f32[2,10,10,32]{3,2,1,0:T(8,128)}', space=vmem, size = 0x28000, scoped, tag = 'scratch operand']
  %s0 = inlined_call_operand.vmem [shape: bf16[2,64,128], index: 0, kind: input, shape index: {}]
  %s1 = inlined_call_operand.vmem [shape: bf16[128,32], index: 1, kind: input, shape index: {}]
  %s2 = inlined_call_operand.vmem [shape: f32[1,32], index: 2, kind: input, shape index: {}]
  %s3 = inlined_call_operand.vmem [shape: bf16[3,96,256], index: 3, kind: input, shape index: {}]
  %s4 = inlined_call_operand.vmem [shape: f32[1,256], index: 4, kind: input, shape index: {}]
  %s5 = inlined_call_operand.vmem [shape: bf16[256,128], index: 5, kind: input, shape index: {}]
  %s6 = inlined_call_operand.vmem [shape: f32[1,128], index: 6, kind: input, shape index: {}]
  %s7 = inlined_call_operand.vmem [shape: f32[2,1,128], index: 7, kind: output, shape index: {0}]
  %s8 = inlined_call_operand.vmem [shape: s32[2,1,128], index: 8, kind: output, shape index: {1}]
  %9 = xla_tuple %s7, %s8
  %s10 = sld [smem:[#allocation0]]
  $region46: #{classification_net_forward.1} parent=0
    _
  %s12 = ssub.s32 1, %s10
  %s13 = scalar_select 0, %s12, %s10
  // Predicated region
  $region2: #{classification_net_forward.1} parent=0 // pred_check
    _
  $region3: #{classification_net_forward.1} parent=0 // pred_check_branch
    %15 = sbr.rel (0) target = $region5
  $region4: #{classification_net_forward.1} parent=0 // pred_region
    _
  $region5: #{classification_net_forward.1} parent=0 // pred_fallthru
    _
  // Predicated region
  $region6: #{classification_net_forward.1} parent=0 // pred_check
    _
  $region7: #{classification_net_forward.1} parent=0 // pred_check_branch
    %17 = sbr.rel (0) target = $region9
  $region8: #{classification_net_forward.1} parent=0 // pred_region
    _
  $region9: #{classification_net_forward.1} parent=0 // pred_fallthru
    _
  // Predicated region
  $region10: #{classification_net_forward.1} parent=0 // pred_check
    _
  $region11: #{classification_net_forward.1} parent=0 // pred_check_branch
    %19 = sbr.rel (0) target = $region13
  $region12: #{classification_net_forward.1} parent=0 // pred_region
    _
  $region13: #{classification_net_forward.1} parent=0 // pred_fallthru
    _
  // Predicated region
  $region14: #{classification_net_forward.1} parent=0 // pred_check
    _
  $region15: #{classification_net_forward.1} parent=0 // pred_check_branch
    %21 = sbr.rel (0) target = $region17
  $region16: #{classification_net_forward.1} parent=0 // pred_region
    _
  $region17: #{classification_net_forward.1} parent=0 // pred_fallthru
    _
  // Predicated region
  $region18: #{classification_net_forward.1} parent=0 // pred_check
    _
  $region19: #{classification_net_forward.1} parent=0 // pred_check_branch
    %23 = sbr.rel (0) target = $region21
  $region20: #{classification_net_forward.1} parent=0 // pred_region
    _
  $region21: #{classification_net_forward.1} parent=0 // pred_fallthru
    _
  // Predicated region
  $region22: #{classification_net_forward.1} parent=0 // pred_check
    _
  $region23: #{classification_net_forward.1} parent=0 // pred_check_branch
    %25 = sbr.rel (0) target = $region25
  $region24: #{classification_net_forward.1} parent=0 // pred_region
    _
  $region25: #{classification_net_forward.1} parent=0 // pred_fallthru
    _
  // Predicated region
  $region26: #{classification_net_forward.1} parent=0 // pred_check
    _
  $region27: #{classification_net_forward.1} parent=0 // pred_check_branch
    %27 = sbr.rel (0) target = $region29
  $region28: #{classification_net_forward.1} parent=0 // pred_region
    _
  $region29: #{classification_net_forward.1} parent=0 // pred_fallthru
    _
  %v29 = vld [vmem:[%s0] sm:$0xf]
  %v30 = vld [vmem:[%s0 + $0x4] sm:$0xf]
  %v31 = vld [vmem:[%s0 + $0x8] sm:$0xf]
  %v32 = vld [vmem:[%s0 + $0xc] sm:$0xf]
  %v33 = vld [vmem:[%s0 + $0x10] sm:$0xf]
  %v34 = vld [vmem:[%s0 + $0x14] sm:$0xf]
  %v35 = vld [vmem:[%s0 + $0x18] sm:$0xf]
  %v36 = vld [vmem:[%s0 + $0x1c] sm:$0xf]
  %v37 = vld [vmem:[%s0 + $0x20] sm:$0xf]
  %v38 = vld [vmem:[%s0 + $0x24] sm:$0xf]
  %v39 = vld [vmem:[%s0 + $0x28] sm:$0xf]
  %v40 = vld [vmem:[%s0 + $0x2c] sm:$0xf]
  %v41 = vld [vmem:[%s0 + $0x30] sm:$0xf]
  %v42 = vld [vmem:[%s0 + $0x34] sm:$0xf]
  %v43 = vld [vmem:[%s0 + $0x38] sm:$0xf]
  %v44 = vld [vmem:[%s0 + $0x3c] sm:$0xf]
  %v45 = vld [vmem:[%s1] sm:$0xf]
  %v46 = vld [vmem:[%s1 + $0x4] sm:$0xf]
  %v47 = vld [vmem:[%s1 + $0x8] sm:$0xf]
  %v48 = vld [vmem:[%s1 + $0xc] sm:$0xf]
  %v49 = vld [vmem:[%s1 + $0x10] sm:$0xf]
  %v50 = vld [vmem:[%s1 + $0x14] sm:$0xf]
  %v51 = vld [vmem:[%s1 + $0x18] sm:$0xf]
  %v52 = vld [vmem:[%s1 + $0x1c] sm:$0xf]
  %v53 = vld [vmem:[%s1 + $0x20] sm:$0xf]
  %v54 = vld [vmem:[%s1 + $0x24] sm:$0xf]
  %v55 = vld [vmem:[%s1 + $0x28] sm:$0xf]
  %v56 = vld [vmem:[%s1 + $0x2c] sm:$0xf]
  %v57 = vld [vmem:[%s1 + $0x30] sm:$0xf]
  %v58 = vld [vmem:[%s1 + $0x34] sm:$0xf]
  %v59 = vld [vmem:[%s1 + $0x38] sm:$0xf]
  %v60 = vld [vmem:[%s1 + $0x3c] sm:$0xf]
  %v61 = vld [vmem:[%s2] sm:$0x1]
  %v63 = vlaneseq
  %v64 = vshrl.u32 %v63, 7
  %v65 = vsub.s32 0, %v64
  %v66 = vrot.slane %v61, %v65
  %v84 = vunpack.c.l.b16 %v29
  %v85 = vunpack.c.l.b16 %v30
  %v86 = vunpack.c.l.b16 %v31
  %v87 = vunpack.c.l.b16 %v32
  %v88 = vunpack.c.l.b16 %v33
  %v89 = vunpack.c.l.b16 %v34
  %v90 = vunpack.c.l.b16 %v35
  %v91 = vunpack.c.l.b16 %v36
  %v92 = vunpack.c.l.b16 %v37
  %v93 = vunpack.c.l.b16 %v38
  %v94 = vunpack.c.l.b16 %v39
  %v95 = vunpack.c.l.b16 %v40
  %v96 = vunpack.c.l.b16 %v41
  %v97 = vunpack.c.l.b16 %v42
  %v98 = vunpack.c.l.b16 %v43
  %v99 = vunpack.c.l.b16 %v44
  %v100 = vpack.c.b16 %v85, %v84
  %v101 = vpack.c.b16 %v87, %v86
  %v102 = vpack.c.b16 %v89, %v88
  %v103 = vpack.c.b16 %v91, %v90
  %v104 = vpack.c.b16 %v93, %v92
  %v105 = vpack.c.b16 %v95, %v94
  %v106 = vpack.c.b16 %v97, %v96
  %v107 = vpack.c.b16 %v99, %v98
  %v132 = vunpack.c.l.b16 %v45
  %v133 = vunpack.c.l.b16 %v46
  %v134 = vunpack.c.l.b16 %v47
  %v135 = vunpack.c.l.b16 %v48
  %v136 = vunpack.c.l.b16 %v49
  %v137 = vunpack.c.l.b16 %v50
  %v138 = vunpack.c.l.b16 %v51
  %v139 = vunpack.c.l.b16 %v52
  %v140 = vunpack.c.l.b16 %v53
  %v141 = vunpack.c.l.b16 %v54
  %v142 = vunpack.c.l.b16 %v55
  %v143 = vunpack.c.l.b16 %v56
  %v144 = vunpack.c.l.b16 %v57
  %v145 = vunpack.c.l.b16 %v58
  %v146 = vunpack.c.l.b16 %v59
  %v147 = vunpack.c.l.b16 %v60
  %v148 = vpack.c.b16 %v133, %v132
  %v149 = vpack.c.b16 %v135, %v134
  %v150 = vpack.c.b16 %v137, %v136
  %v151 = vpack.c.b16 %v139, %v138
  %v152 = vpack.c.b16 %v141, %v140
  %v153 = vpack.c.b16 %v143, %v142
  %v154 = vpack.c.b16 %v145, %v144
  %v155 = vpack.c.b16 %v147, %v146
  %164 = vmatprep.subr.bf16.mxu0 0
  %165 = vmatpush1.bf16.msra.mxu0 %v148
  %166 = vmatprep.subr.bf16.mxu0 0
  %167 = vmatpush1.bf16.msra.mxu0 %v149
  %168 = vmatprep.subr.bf16.mxu0 0
  %169 = vmatpush1.bf16.msra.mxu0 %v150
  %170 = vmatprep.subr.bf16.mxu0 0
  %171 = vmatpush1.bf16.msra.mxu0 %v151
  %172 = vmatprep.subr.bf16.mxu0 0
  %173 = vmatpush1.bf16.msra.mxu0 %v152
  %174 = vmatprep.subr.bf16.mxu0 0
  %175 = vmatpush1.bf16.msra.mxu0 %v153
  %176 = vmatprep.subr.bf16.mxu0 0
  %177 = vmatpush1.bf16.msra.mxu0 %v154
  %178 = vmatprep.subr.bf16.mxu0 0
  %179 = vmatpush1.bf16.msra.mxu0 %v155
  %180 = vmatprep.subr.bf16.mxu0 0
  %181 = vmatpush1.bf16.msra.mxu0 0
  %182 = vmatprep.subr.bf16.mxu0 0
  %183 = vmatpush1.bf16.msra.mxu0 0
  %184 = vmatprep.subr.bf16.mxu0 0
  %185 = vmatpush1.bf16.msra.mxu0 0
  %186 = vmatprep.subr.bf16.mxu0 0
  %187 = vmatpush1.bf16.msra.mxu0 0
  %188 = vmatprep.subr.bf16.mxu0 0
  %189 = vmatpush1.bf16.msra.mxu0 0
  %190 = vmatprep.subr.bf16.mxu0 0
  %191 = vmatpush1.bf16.msra.mxu0 0
  %192 = vmatprep.subr.bf16.mxu0 0
  %193 = vmatpush1.bf16.msra.mxu0 0
  %194 = vmatprep.subr.bf16.mxu0 0
  %195 = vmatpush1.bf16.msra.mxu0 0
  %196 = vmatprep.mubr.bf16.mxu0 0
  %197 = vmatmul.mubr.bf16.gmra.mrb[0].mxu0 %v100
  %v198 = vpop.f32.mrb[0].mxu0
  %v199 = vadd.f32 %v66, %v198
  %v200 = vpop.f32.mrb[0].mxu0
  %v201 = vpop.f32.mrb[0].mxu0
  %v202 = vadd.f32 %v66, %v201
  %v203 = vpop.f32.mrb[0].mxu0
  %204 = vmatprep.mubr.bf16.mxu0 0
  %205 = vmatmul.mubr.bf16.gmra.mrb[0].mxu0 %v101
  %v206 = vpop.f32.mrb[0].mxu0
  %v207 = vadd.f32 %v66, %v206
  %v208 = vpop.f32.mrb[0].mxu0
  %v209 = vpop.f32.mrb[0].mxu0
  %v210 = vadd.f32 %v66, %v209
  %v211 = vpop.f32.mrb[0].mxu0
  %212 = vmatprep.mubr.bf16.mxu0 0
  %213 = vmatmul.mubr.bf16.gmra.mrb[0].mxu0 %v102
  %v214 = vpop.f32.mrb[0].mxu0
  %v215 = vadd.f32 %v66, %v214
  %v216 = vpop.f32.mrb[0].mxu0
  %v217 = vpop.f32.mrb[0].mxu0
  %v218 = vadd.f32 %v66, %v217
  %v219 = vpop.f32.mrb[0].mxu0
  %220 = vmatprep.mubr.bf16.mxu0 0
  %221 = vmatmul.mubr.bf16.gmra.mrb[0].mxu0 %v103
  %v222 = vpop.f32.mrb[0].mxu0
  %v223 = vadd.f32 %v66, %v222
  %v224 = vpop.f32.mrb[0].mxu0
  %v225 = vpop.f32.mrb[0].mxu0
  %v226 = vadd.f32 %v66, %v225
  %v227 = vpop.f32.mrb[0].mxu0
  %228 = vmatprep.mubr.bf16.mxu0 0
  %229 = vmatmul.mubr.bf16.gmra.mrb[0].mxu0 %v104
  %v230 = vpop.f32.mrb[0].mxu0
  %v231 = vadd.f32 %v66, %v230
  %v232 = vpop.f32.mrb[0].mxu0
  %v233 = vpop.f32.mrb[0].mxu0
  %v234 = vadd.f32 %v66, %v233
  %v235 = vpop.f32.mrb[0].mxu0
  %236 = vmatprep.mubr.bf16.mxu0 0
  %237 = vmatmul.mubr.bf16.gmra.mrb[0].mxu0 %v105
  %v238 = vpop.f32.mrb[0].mxu0
  %v239 = vadd.f32 %v66, %v238
  %v240 = vpop.f32.mrb[0].mxu0
  %v241 = vpop.f32.mrb[0].mxu0
  %v242 = vadd.f32 %v66, %v241
  %v243 = vpop.f32.mrb[0].mxu0
  %244 = vmatprep.mubr.bf16.mxu0 0
  %245 = vmatmul.mubr.bf16.gmra.mrb[0].mxu0 %v106
  %v246 = vpop.f32.mrb[0].mxu0
  %v247 = vadd.f32 %v66, %v246
  %v248 = vpop.f32.mrb[0].mxu0
  %v249 = vpop.f32.mrb[0].mxu0
  %v250 = vadd.f32 %v66, %v249
  %v251 = vpop.f32.mrb[0].mxu0
  %252 = vmatprep.mubr.bf16.mxu0 0
  %253 = vmatmul.mubr.bf16.gmra.mrb[0].mxu0 %v107
  %v254 = vpop.f32.mrb[0].mxu0
  %v255 = vadd.f32 %v66, %v254
  %v256 = vpop.f32.mrb[0].mxu0
  %v257 = vpop.f32.mrb[0].mxu0
  %v258 = vadd.f32 %v66, %v257
  %v259 = vpop.f32.mrb[0].mxu0
  %260 = vdwg.mxu0
  %v261 = vmax.f32 %v199, 0.0
  %v262 = vmax.f32 %v202, 0.0
  %v263 = vmax.f32 %v207, 0.0
  %v264 = vmax.f32 %v210, 0.0
  %v265 = vmax.f32 %v215, 0.0
  %v266 = vmax.f32 %v218, 0.0
  %v267 = vmax.f32 %v223, 0.0
  %v268 = vmax.f32 %v226, 0.0
  %v269 = vmax.f32 %v231, 0.0
  %v270 = vmax.f32 %v234, 0.0
  %v271 = vmax.f32 %v239, 0.0
  %v272 = vmax.f32 %v242, 0.0
  %v273 = vmax.f32 %v247, 0.0
  %v274 = vmax.f32 %v250, 0.0
  %v275 = vmax.f32 %v255, 0.0
  %v276 = vmax.f32 %v258, 0.0
  %vm277 = vcmask 261120
  %278 = vst.msk [vmem:[#allocation2] sm:$0xff] %vm277, 0.0
  %vm279 = vcmask 254976
  %280 = vst.msk [vmem:[#allocation2 + $0x8] sm:$0x3] %vm279, 0.0
  %281 = vst.msk [vmem:[#allocation2 + $0x10] sm:$0xff] %vm277, 0.0
  %282 = vst.msk [vmem:[#allocation2 + $0x18] sm:$0x3] %vm279, 0.0
  %283 = vst.msk [vmem:[#allocation2 + $0x20] sm:$0xff] %vm277, 0.0
  %284 = vst.msk [vmem:[#allocation2 + $0x28] sm:$0x3] %vm279, 0.0
  %285 = vst.msk [vmem:[#allocation2 + $0x30] sm:$0xff] %vm277, 0.0
  %286 = vst.msk [vmem:[#allocation2 + $0x38] sm:$0x3] %vm279, 0.0
  %287 = vst.msk [vmem:[#allocation2 + $0x40] sm:$0xff] %vm277, 0.0
  %288 = vst.msk [vmem:[#allocation2 + $0x48] sm:$0x3] %vm279, 0.0
  %289 = vst.msk [vmem:[#allocation2 + $0x50] sm:$0xff] %vm277, 0.0
  %290 = vst.msk [vmem:[#allocation2 + $0x58] sm:$0x3] %vm279, 0.0
  %291 = vst.msk [vmem:[#allocation2 + $0x60] sm:$0xff] %vm277, 0.0
  %292 = vst.msk [vmem:[#allocation2 + $0x68] sm:$0x3] %vm279, 0.0
  %293 = vst.msk [vmem:[#allocation2 + $0x70] sm:$0xff] %vm277, 0.0
  %294 = vst.msk [vmem:[#allocation2 + $0x78] sm:$0x3] %vm279, 0.0
  %295 = vst.msk [vmem:[#allocation2 + $0x80] sm:$0xff] %vm277, 0.0
  %296 = vst.msk [vmem:[#allocation2 + $0x88] sm:$0x3] %vm279, 0.0
  %297 = vst.msk [vmem:[#allocation2 + $0x90] sm:$0xff] %vm277, 0.0
  %298 = vst.msk [vmem:[#allocation2 + $0x98] sm:$0x3] %vm279, 0.0
  %299 = vst.msk [vmem:[#allocation2 + $0xa0] sm:$0xff] %vm277, 0.0
  %300 = vst.msk [vmem:[#allocation2 + $0xa8] sm:$0x3] %vm279, 0.0
  %301 = vst.msk [vmem:[#allocation2 + $0xb0] sm:$0xff] %vm277, 0.0
  %302 = vst.msk [vmem:[#allocation2 + $0xb8] sm:$0x3] %vm279, 0.0
  %303 = vst.msk [vmem:[#allocation2 + $0xc0] sm:$0xff] %vm277, 0.0
  %304 = vst.msk [vmem:[#allocation2 + $0xc8] sm:$0x3] %vm279, 0.0
  %305 = vst.msk [vmem:[#allocation2 + $0xd0] sm:$0xff] %vm277, 0.0
  %306 = vst.msk [vmem:[#allocation2 + $0xd8] sm:$0x3] %vm279, 0.0
  %307 = vst.msk [vmem:[#allocation2 + $0xe0] sm:$0xff] %vm277, 0.0
  %308 = vst.msk [vmem:[#allocation2 + $0xe8] sm:$0x3] %vm279, 0.0
  %309 = vst.msk [vmem:[#allocation2 + $0xf0] sm:$0xff] %vm277, 0.0
  %310 = vst.msk [vmem:[#allocation2 + $0xf8] sm:$0x3] %vm279, 0.0
  %311 = vst.msk [vmem:[#allocation2 + $0x100] sm:$0xff] %vm277, 0.0
  %312 = vst.msk [vmem:[#allocation2 + $0x108] sm:$0x3] %vm279, 0.0
  %313 = vst.msk [vmem:[#allocation2 + $0x110] sm:$0xff] %vm277, 0.0
  %314 = vst.msk [vmem:[#allocation2 + $0x118] sm:$0x3] %vm279, 0.0
  %315 = vst.msk [vmem:[#allocation2 + $0x120] sm:$0xff] %vm277, 0.0
  %316 = vst.msk [vmem:[#allocation2 + $0x128] sm:$0x3] %vm279, 0.0
  %317 = vst.msk [vmem:[#allocation2 + $0x130] sm:$0xff] %vm277, 0.0
  %318 = vst.msk [vmem:[#allocation2 + $0x138] sm:$0x3] %vm279, 0.0
  %s319 = scalar_lea.vmem [#allocation2], 16
  %320 = vst.msk [vmem:[%s319 + $0x1] sm:$0xff] %vm277, %v261
  %321 = vst.msk [vmem:[%s319 + $0x11] sm:$0xff] %vm277, %v262
  %322 = vst.msk [vmem:[%s319 + $0x21] sm:$0xff] %vm277, %v263
  %323 = vst.msk [vmem:[%s319 + $0x31] sm:$0xff] %vm277, %v264
  %324 = vst.msk [vmem:[%s319 + $0x41] sm:$0xff] %vm277, %v265
  %325 = vst.msk [vmem:[%s319 + $0x51] sm:$0xff] %vm277, %v266
  %326 = vst.msk [vmem:[%s319 + $0x61] sm:$0xff] %vm277, %v267
  %327 = vst.msk [vmem:[%s319 + $0x71] sm:$0xff] %vm277, %v268
  %328 = vst.msk [vmem:[%s319 + $0xa1] sm:$0xff] %vm277, %v269
  %329 = vst.msk [vmem:[%s319 + $0xb1] sm:$0xff] %vm277, %v270
  %330 = vst.msk [vmem:[%s319 + $0xc1] sm:$0xff] %vm277, %v271
  %331 = vst.msk [vmem:[%s319 + $0xd1] sm:$0xff] %vm277, %v272
  %332 = vst.msk [vmem:[%s319 + $0xe1] sm:$0xff] %vm277, %v273
  %333 = vst.msk [vmem:[%s319 + $0xf1] sm:$0xff] %vm277, %v274
  %334 = vst.msk [vmem:[%s319 + $0x101] sm:$0xff] %vm277, %v275
  %335 = vst.msk [vmem:[%s319 + $0x111] sm:$0xff] %vm277, %v276
  %v336 = vld [vmem:[#allocation2] sm:$0xff]
  %v337 = vld [vmem:[#allocation2 + $0x10] sm:$0xff]
  %v338 = vld [vmem:[#allocation2 + $0x20] sm:$0xff]
  %v339 = vld [vmem:[#allocation2 + $0x30] sm:$0xff]
  %v340 = vld [vmem:[#allocation2 + $0x40] sm:$0xff]
  %v341 = vld [vmem:[#allocation2 + $0x50] sm:$0xff]
  %v342 = vld [vmem:[#allocation2 + $0x60] sm:$0xff]
  %v343 = vld [vmem:[#allocation2 + $0x70] sm:$0xff]
  %v344 = vld [vmem:[#allocation2 + $0x80] sm:$0xff]
  %v345 = vld [vmem:[#allocation2 + $0x90] sm:$0xff]
  %v346 = vld [vmem:[#allocation2 + $0xa0] sm:$0xff]
  %v347 = vld [vmem:[#allocation2 + $0xb0] sm:$0xff]
  %v348 = vld [vmem:[#allocation2 + $0xc0] sm:$0xff]
  %v349 = vld [vmem:[#allocation2 + $0xd0] sm:$0xff]
  %v350 = vld [vmem:[#allocation2 + $0xe0] sm:$0xff]
  %v351 = vld [vmem:[#allocation2 + $0xf0] sm:$0xff]
  %v352 = vld [vmem:[#allocation2 + $0x100] sm:$0xff]
  %v353 = vld [vmem:[#allocation2 + $0x110] sm:$0xff]
  %v354 = vld [vmem:[#allocation2 + $0x120] sm:$0xff]
  %v355 = vld [vmem:[#allocation2 + $0x130] sm:$0xff]
  %v356 = vld [vmem:[#allocation2 + $0x1] sm:$0xff]
  %v357 = vld [vmem:[#allocation2 + $0x11] sm:$0xff]
  %v358 = vld [vmem:[#allocation2 + $0x21] sm:$0xff]
  %v359 = vld [vmem:[#allocation2 + $0x31] sm:$0xff]
  %v360 = vld [vmem:[#allocation2 + $0x41] sm:$0xff]
  %v361 = vld [vmem:[#allocation2 + $0x51] sm:$0xff]
  %v362 = vld [vmem:[#allocation2 + $0x61] sm:$0xff]
  %v363 = vld [vmem:[#allocation2 + $0x71] sm:$0xff]
  %v364 = vld [vmem:[#allocation2 + $0x81] sm:$0xff]
  %v365 = vld [vmem:[#allocation2 + $0x91] sm:$0xff]
  %v366 = vld [vmem:[#allocation2 + $0xa1] sm:$0xff]
  %v367 = vld [vmem:[#allocation2 + $0xb1] sm:$0xff]
  %v368 = vld [vmem:[#allocation2 + $0xc1] sm:$0xff]
  %v369 = vld [vmem:[#allocation2 + $0xd1] sm:$0xff]
  %v370 = vld [vmem:[#allocation2 + $0xe1] sm:$0xff]
  %v371 = vld [vmem:[#allocation2 + $0xf1] sm:$0xff]
  %v372 = vld [vmem:[#allocation2 + $0x101] sm:$0xff]
  %v373 = vld [vmem:[#allocation2 + $0x111] sm:$0xff]
  %v374 = vld [vmem:[#allocation2 + $0x121] sm:$0xff]
  %v375 = vld [vmem:[#allocation2 + $0x131] sm:$0xff]
  %v376 = vld [vmem:[#allocation2 + $0x2] sm:$0xff]
  %v377 = vld [vmem:[#allocation2 + $0x12] sm:$0xff]
  %v378 = vld [vmem:[#allocation2 + $0x22] sm:$0xff]
  %v379 = vld [vmem:[#allocation2 + $0x32] sm:$0xff]
  %v380 = vld [vmem:[#allocation2 + $0x42] sm:$0xff]
  %v381 = vld [vmem:[#allocation2 + $0x52] sm:$0xff]
  %v382 = vld [vmem:[#allocation2 + $0x62] sm:$0xff]
  %v383 = vld [vmem:[#allocation2 + $0x72] sm:$0xff]
  %v384 = vld [vmem:[#allocation2 + $0x82] sm:$0xff]
  %v385 = vld [vmem:[#allocation2 + $0x92] sm:$0xff]
  %v386 = vld [vmem:[#allocation2 + $0xa2] sm:$0xff]
  %v387 = vld [vmem:[#allocation2 + $0xb2] sm:$0xff]
  %v388 = vld [vmem:[#allocation2 + $0xc2] sm:$0xff]
  %v389 = vld [vmem:[#allocation2 + $0xd2] sm:$0xff]
  %v390 = vld [vmem:[#allocation2 + $0xe2] sm:$0xff]
  %v391 = vld [vmem:[#allocation2 + $0xf2] sm:$0xff]
  %v392 = vld [vmem:[#allocation2 + $0x102] sm:$0xff]
  %v393 = vld [vmem:[#allocation2 + $0x112] sm:$0xff]
  %v394 = vld [vmem:[#allocation2 + $0x122] sm:$0xff]
  %v395 = vld [vmem:[#allocation2 + $0x132] sm:$0xff]
  %416 = vrot.lane.b32.xlu0 %v356, 32
  %v417 = vpop.permute.xlu0 %416
  %418 = vrot.lane.b32.xlu0 %v357, 32
  %v419 = vpop.permute.xlu0 %418
  %420 = vrot.lane.b32.xlu0 %v358, 32
  %v421 = vpop.permute.xlu0 %420
  %422 = vrot.lane.b32.xlu0 %v359, 32
  %v423 = vpop.permute.xlu0 %422
  %424 = vrot.lane.b32.xlu0 %v360, 32
  %v425 = vpop.permute.xlu0 %424
  %426 = vrot.lane.b32.xlu0 %v361, 32
  %v427 = vpop.permute.xlu0 %426
  %428 = vrot.lane.b32.xlu0 %v362, 32
  %v429 = vpop.permute.xlu0 %428
  %430 = vrot.lane.b32.xlu0 %v363, 32
  %v431 = vpop.permute.xlu0 %430
  %432 = vrot.lane.b32.xlu0 %v364, 32
  %v433 = vpop.permute.xlu0 %432
  %434 = vrot.lane.b32.xlu0 %v365, 32
  %v435 = vpop.permute.xlu0 %434
  %436 = vrot.lane.b32.xlu0 %v366, 32
  %v437 = vpop.permute.xlu0 %436
  %438 = vrot.lane.b32.xlu0 %v367, 32
  %v439 = vpop.permute.xlu0 %438
  %440 = vrot.lane.b32.xlu0 %v368, 32
  %v441 = vpop.permute.xlu0 %440
  %442 = vrot.lane.b32.xlu0 %v369, 32
  %v443 = vpop.permute.xlu0 %442
  %444 = vrot.lane.b32.xlu0 %v370, 32
  %v445 = vpop.permute.xlu0 %444
  %446 = vrot.lane.b32.xlu0 %v371, 32
  %v447 = vpop.permute.xlu0 %446
  %448 = vrot.lane.b32.xlu0 %v372, 32
  %v449 = vpop.permute.xlu0 %448
  %450 = vrot.lane.b32.xlu0 %v373, 32
  %v451 = vpop.permute.xlu0 %450
  %452 = vrot.lane.b32.xlu0 %v374, 32
  %v453 = vpop.permute.xlu0 %452
  %454 = vrot.lane.b32.xlu0 %v375, 32
  %v455 = vpop.permute.xlu0 %454
  %496 = vrot.lane.b32.xlu0 %v376, 64
  %v497 = vpop.permute.xlu0 %496
  %498 = vrot.lane.b32.xlu0 %v377, 64
  %v499 = vpop.permute.xlu0 %498
  %500 = vrot.lane.b32.xlu0 %v378, 64
  %v501 = vpop.permute.xlu0 %500
  %502 = vrot.lane.b32.xlu0 %v379, 64
  %v503 = vpop.permute.xlu0 %502
  %504 = vrot.lane.b32.xlu0 %v380, 64
  %v505 = vpop.permute.xlu0 %504
  %506 = vrot.lane.b32.xlu0 %v381, 64
  %v507 = vpop.permute.xlu0 %506
  %508 = vrot.lane.b32.xlu0 %v382, 64
  %v509 = vpop.permute.xlu0 %508
  %510 = vrot.lane.b32.xlu0 %v383, 64
  %v511 = vpop.permute.xlu0 %510
  %512 = vrot.lane.b32.xlu0 %v384, 64
  %v513 = vpop.permute.xlu0 %512
  %514 = vrot.lane.b32.xlu0 %v385, 64
  %v515 = vpop.permute.xlu0 %514
  %516 = vrot.lane.b32.xlu0 %v386, 64
  %v517 = vpop.permute.xlu0 %516
  %518 = vrot.lane.b32.xlu0 %v387, 64
  %v519 = vpop.permute.xlu0 %518
  %520 = vrot.lane.b32.xlu0 %v388, 64
  %v521 = vpop.permute.xlu0 %520
  %522 = vrot.lane.b32.xlu0 %v389, 64
  %v523 = vpop.permute.xlu0 %522
  %524 = vrot.lane.b32.xlu0 %v390, 64
  %v525 = vpop.permute.xlu0 %524
  %526 = vrot.lane.b32.xlu0 %v391, 64
  %v527 = vpop.permute.xlu0 %526
  %528 = vrot.lane.b32.xlu0 %v392, 64
  %v529 = vpop.permute.xlu0 %528
  %530 = vrot.lane.b32.xlu0 %v393, 64
  %v531 = vpop.permute.xlu0 %530
  %532 = vrot.lane.b32.xlu0 %v394, 64
  %v533 = vpop.permute.xlu0 %532
  %534 = vrot.lane.b32.xlu0 %v395, 64
  %v535 = vpop.permute.xlu0 %534
  %v556 = vsel %vm277, %v336, %v417
  %v557 = vsel %vm277, %v337, %v419
  %v558 = vsel %vm277, %v338, %v421
  %v559 = vsel %vm277, %v339, %v423
  %v560 = vsel %vm277, %v340, %v425
  %v561 = vsel %vm277, %v341, %v427
  %v562 = vsel %vm277, %v342, %v429
  %v563 = vsel %vm277, %v343, %v431
  %v564 = vsel %vm277, %v344, %v433
  %v565 = vsel %vm277, %v345, %v435
  %v566 = vsel %vm277, %v346, %v437
  %v567 = vsel %vm277, %v347, %v439
  %v568 = vsel %vm277, %v348, %v441
  %v569 = vsel %vm277, %v349, %v443
  %v570 = vsel %vm277, %v350, %v445
  %v571 = vsel %vm277, %v351, %v447
  %v572 = vsel %vm277, %v352, %v449
  %v573 = vsel %vm277, %v353, %v451
  %v574 = vsel %vm277, %v354, %v453
  %v575 = vsel %vm277, %v355, %v455
  %vm576 = vcmask 523264
  %v577 = vsel %vm576, %v556, %v497
  %v578 = vsel %vm576, %v557, %v499
  %v579 = vsel %vm576, %v558, %v501
  %v580 = vsel %vm576, %v559, %v503
  %v581 = vsel %vm576, %v560, %v505
  %v582 = vsel %vm576, %v561, %v507
  %v583 = vsel %vm576, %v562, %v509
  %v584 = vsel %vm576, %v563, %v511
  %v585 = vsel %vm576, %v564, %v513
  %v586 = vsel %vm576, %v565, %v515
  %v587 = vsel %vm576, %v566, %v517
  %v588 = vsel %vm576, %v567, %v519
  %v589 = vsel %vm576, %v568, %v521
  %v590 = vsel %vm576, %v569, %v523
  %v591 = vsel %vm576, %v570, %v525
  %v592 = vsel %vm576, %v571, %v527
  %v593 = vsel %vm576, %v572, %v529
  %v594 = vsel %vm576, %v573, %v531
  %v595 = vsel %vm576, %v574, %v533
  %v596 = vsel %vm576, %v575, %v535
  %v597 = vpack.c.bf16 %v577, %v577
  %v598 = vpack.c.bf16 %v578, %v578
  %v599 = vpack.c.bf16 %v579, %v579
  %v600 = vpack.c.bf16 %v580, %v580
  %v601 = vpack.c.bf16 %v581, %v581
  %v602 = vpack.c.bf16 %v582, %v582
  %v603 = vpack.c.bf16 %v583, %v583
  %v604 = vpack.c.bf16 %v584, %v584
  %v605 = vpack.c.bf16 %v585, %v585
  %v606 = vpack.c.bf16 %v586, %v586
  %v607 = vpack.c.bf16 %v587, %v587
  %v608 = vpack.c.bf16 %v588, %v588
  %v609 = vpack.c.bf16 %v589, %v589
  %v610 = vpack.c.bf16 %v590, %v590
  %v611 = vpack.c.bf16 %v591, %v591
  %v612 = vpack.c.bf16 %v592, %v592
  %v613 = vpack.c.bf16 %v593, %v593
  %v614 = vpack.c.bf16 %v594, %v594
  %v615 = vpack.c.bf16 %v595, %v595
  %v616 = vpack.c.bf16 %v596, %v596
  %v617 = vld [vmem:[%s4] sm:$0x3]
  %v619 = vlaneseq
  %v620 = vshrl.u32 %v619, 7
  %v621 = vsub.s32 0, %v620
  %v622 = vrot.slane %v617, %v621
  %v623 = vlaneseq
  %v624 = vshrl.u32 %v623, 7
  %v625 = vsub.s32 1, %v624
  %v626 = vrot.slane %v617, %v625
  %v629 = vld [vmem:[%s3] sm:$0xff]
  %v630 = vld [vmem:[%s3 + $0x8] sm:$0xff]
  %v631 = vld [vmem:[%s3 + $0x10] sm:$0xff]
  %v632 = vld [vmem:[%s3 + $0x18] sm:$0xff]
  %v633 = vld [vmem:[%s3 + $0x20] sm:$0xff]
  %v634 = vld [vmem:[%s3 + $0x28] sm:$0xff]
  %v635 = vld [vmem:[%s3 + $0x30] sm:$0xff]
  %v636 = vld [vmem:[%s3 + $0x38] sm:$0xff]
  %v637 = vld [vmem:[%s3 + $0x40] sm:$0xff]
  %v638 = vld [vmem:[%s3 + $0x48] sm:$0xff]
  %v639 = vld [vmem:[%s3 + $0x50] sm:$0xff]
  %v640 = vld [vmem:[%s3 + $0x58] sm:$0xff]
  %v657 = vunpack.c.l.b16 %v597
  %v658 = vunpack.c.l.b16 %v598
  %v659 = vunpack.c.l.b16 %v599
  %v660 = vunpack.c.l.b16 %v600
  %v661 = vunpack.c.l.b16 %v601
  %v662 = vunpack.c.l.b16 %v602
  %v663 = vunpack.c.l.b16 %v603
  %v664 = vunpack.c.l.b16 %v604
  %v665 = vunpack.c.l.b16 %v607
  %v666 = vunpack.c.l.b16 %v608
  %v667 = vunpack.c.l.b16 %v609
  %v668 = vunpack.c.l.b16 %v610
  %v669 = vunpack.c.l.b16 %v611
  %v670 = vunpack.c.l.b16 %v612
  %v671 = vunpack.c.l.b16 %v613
  %v672 = vunpack.c.l.b16 %v614
  %v673 = vpack.c.b16 %v658, %v657
  %v674 = vpack.c.b16 %v660, %v659
  %v675 = vpack.c.b16 %v662, %v661
  %v676 = vpack.c.b16 %v664, %v663
  %v677 = vpack.c.b16 %v666, %v665
  %v678 = vpack.c.b16 %v668, %v667
  %v679 = vpack.c.b16 %v670, %v669
  %v680 = vpack.c.b16 %v672, %v671
  %v693 = vunpack.c.l.b16 %v629
  %v694 = vunpack.c.h.b16 %v629
  %v695 = vunpack.c.l.b16 %v630
  %v696 = vunpack.c.h.b16 %v630
  %v697 = vunpack.c.l.b16 %v631
  %v698 = vunpack.c.h.b16 %v631
  %v699 = vunpack.c.l.b16 %v632
  %v700 = vunpack.c.h.b16 %v632
  %v701 = vunpack.c.l.b16 %v633
  %v702 = vunpack.c.h.b16 %v633
  %v703 = vunpack.c.l.b16 %v634
  %v704 = vunpack.c.h.b16 %v634
  %v705 = vunpack.c.l.b16 %v635
  %v706 = vunpack.c.h.b16 %v635
  %v707 = vunpack.c.l.b16 %v636
  %v708 = vunpack.c.h.b16 %v636
  %v709 = vunpack.c.l.b16 %v637
  %v710 = vunpack.c.h.b16 %v637
  %v711 = vunpack.c.l.b16 %v638
  %v712 = vunpack.c.h.b16 %v638
  %v713 = vunpack.c.l.b16 %v639
  %v714 = vunpack.c.h.b16 %v639
  %v715 = vunpack.c.l.b16 %v640
  %v716 = vunpack.c.h.b16 %v640
  %v717 = vpack.c.b16 %v695, %v693
  %v718 = vpack.c.b16 %v696, %v694
  %v719 = vpack.c.b16 %v699, %v697
  %v720 = vpack.c.b16 %v700, %v698
  %v721 = vpack.c.b16 %v703, %v701
  %v722 = vpack.c.b16 %v704, %v702
  %v723 = vpack.c.b16 %v707, %v705
  %v724 = vpack.c.b16 %v708, %v706
  %v725 = vpack.c.b16 %v711, %v709
  %v726 = vpack.c.b16 %v712, %v710
  %v727 = vpack.c.b16 %v715, %v713
  %v728 = vpack.c.b16 %v716, %v714
  %vm741 = vcmask 785408
  %v743 = vsel %vm741, %v673, 0
  %v746 = vsel %vm741, %v674, 0
  %v749 = vsel %vm741, %v675, 0
  %v752 = vsel %vm741, %v676, 0
  %v755 = vsel %vm741, %v677, 0
  %v758 = vsel %vm741, %v678, 0
  %v761 = vsel %vm741, %v679, 0
  %v764 = vsel %vm741, %v680, 0
  %766 = vmatprep.subr.bf16.mxu0 %v718
  %767 = vmatpush1.bf16.msra.mxu0 %v717
  %768 = vmatprep.subr.bf16.mxu0 %v720
  %769 = vmatpush1.bf16.msra.mxu0 %v719
  %770 = vmatprep.subr.bf16.mxu0 %v722
  %771 = vmatpush1.bf16.msra.mxu0 %v721
  %772 = vmatprep.subr.bf16.mxu0 %v724
  %773 = vmatpush1.bf16.msra.mxu0 %v723
  %774 = vmatprep.subr.bf16.mxu0 %v726
  %775 = vmatpush1.bf16.msra.mxu0 %v725
  %776 = vmatprep.subr.bf16.mxu0 %v728
  %777 = vmatpush1.bf16.msra.mxu0 %v727
  %778 = vmatprep.subr.bf16.mxu0 0
  %779 = vmatpush1.bf16.msra.mxu0 0
  %780 = vmatprep.subr.bf16.mxu0 0
  %781 = vmatpush1.bf16.msra.mxu0 0
  %782 = vmatprep.subr.bf16.mxu0 0
  %783 = vmatpush1.bf16.msra.mxu0 0
  %784 = vmatprep.subr.bf16.mxu0 0
  %785 = vmatpush1.bf16.msra.mxu0 0
  %786 = vmatprep.subr.bf16.mxu0 0
  %787 = vmatpush1.bf16.msra.mxu0 0
  %788 = vmatprep.subr.bf16.mxu0 0
  %789 = vmatpush1.bf16.msra.mxu0 0
  %790 = vmatprep.subr.bf16.mxu0 0
  %791 = vmatpush1.bf16.msra.mxu0 0
  %792 = vmatprep.subr.bf16.mxu0 0
  %793 = vmatpush1.bf16.msra.mxu0 0
  %794 = vmatprep.subr.bf16.mxu0 0
  %795 = vmatpush1.bf16.msra.mxu0 0
  %796 = vmatprep.subr.bf16.mxu0 0
  %797 = vmatpush1.bf16.msra.mxu0 0
  %798 = vmatprep.mubr.bf16.mxu0 0
  %799 = vmatmul.mubr.bf16.gmra.mrb[0].mxu0 %v743
  %v800 = vpop.f32.mrb[0].mxu0
  %v801 = vadd.f32 0.0, %v800
  %v802 = vpop.f32.mrb[0].mxu0
  %v803 = vadd.f32 0.0, %v802
  %v804 = vpop.f32.mrb[0].mxu0
  %v805 = vadd.f32 0.0, %v804
  %v806 = vpop.f32.mrb[0].mxu0
  %v807 = vadd.f32 0.0, %v806
  %808 = vmatprep.mubr.bf16.mxu0 0
  %809 = vmatmul.mubr.bf16.gmra.mrb[0].mxu0 %v746
  %v810 = vpop.f32.mrb[0].mxu0
  %v811 = vadd.f32 0.0, %v810
  %v812 = vpop.f32.mrb[0].mxu0
  %v813 = vadd.f32 0.0, %v812
  %v814 = vpop.f32.mrb[0].mxu0
  %v815 = vadd.f32 0.0, %v814
  %v816 = vpop.f32.mrb[0].mxu0
  %v817 = vadd.f32 0.0, %v816
  %818 = vmatprep.mubr.bf16.mxu0 0
  %819 = vmatmul.mubr.bf16.gmra.mrb[0].mxu0 %v749
  %v820 = vpop.f32.mrb[0].mxu0
  %v821 = vadd.f32 0.0, %v820
  %v822 = vpop.f32.mrb[0].mxu0
  %v823 = vadd.f32 0.0, %v822
  %v824 = vpop.f32.mrb[0].mxu0
  %v825 = vadd.f32 0.0, %v824
  %v826 = vpop.f32.mrb[0].mxu0
  %v827 = vadd.f32 0.0, %v826
  %828 = vmatprep.mubr.bf16.mxu0 0
  %829 = vmatmul.mubr.bf16.gmra.mrb[0].mxu0 %v752
  %v830 = vpop.f32.mrb[0].mxu0
  %v831 = vadd.f32 0.0, %v830
  %v832 = vpop.f32.mrb[0].mxu0
  %v833 = vadd.f32 0.0, %v832
  %v834 = vpop.f32.mrb[0].mxu0
  %v835 = vadd.f32 0.0, %v834
  %v836 = vpop.f32.mrb[0].mxu0
  %v837 = vadd.f32 0.0, %v836
  %838 = vmatprep.mubr.bf16.mxu0 0
  %839 = vmatmul.mubr.bf16.gmra.mrb[0].mxu0 %v755
  %v840 = vpop.f32.mrb[0].mxu0
  %v841 = vadd.f32 0.0, %v840
  %v842 = vpop.f32.mrb[0].mxu0
  %v843 = vadd.f32 0.0, %v842
  %v844 = vpop.f32.mrb[0].mxu0
  %v845 = vadd.f32 0.0, %v844
  %v846 = vpop.f32.mrb[0].mxu0
  %v847 = vadd.f32 0.0, %v846
  %848 = vmatprep.mubr.bf16.mxu0 0
  %849 = vmatmul.mubr.bf16.gmra.mrb[0].mxu0 %v758
  %v850 = vpop.f32.mrb[0].mxu0
  %v851 = vadd.f32 0.0, %v850
  %v852 = vpop.f32.mrb[0].mxu0
  %v853 = vadd.f32 0.0, %v852
  %v854 = vpop.f32.mrb[0].mxu0
  %v855 = vadd.f32 0.0, %v854
  %v856 = vpop.f32.mrb[0].mxu0
  %v857 = vadd.f32 0.0, %v856
  %858 = vmatprep.mubr.bf16.mxu0 0
  %859 = vmatmul.mubr.bf16.gmra.mrb[0].mxu0 %v761
  %v860 = vpop.f32.mrb[0].mxu0
  %v861 = vadd.f32 0.0, %v860
  %v862 = vpop.f32.mrb[0].mxu0
  %v863 = vadd.f32 0.0, %v862
  %v864 = vpop.f32.mrb[0].mxu0
  %v865 = vadd.f32 0.0, %v864
  %v866 = vpop.f32.mrb[0].mxu0
  %v867 = vadd.f32 0.0, %v866
  %868 = vmatprep.mubr.bf16.mxu0 0
  %869 = vmatmul.mubr.bf16.gmra.mrb[0].mxu0 %v764
  %v870 = vpop.f32.mrb[0].mxu0
  %v871 = vadd.f32 0.0, %v870
  %v872 = vpop.f32.mrb[0].mxu0
  %v873 = vadd.f32 0.0, %v872
  %v874 = vpop.f32.mrb[0].mxu0
  %v875 = vadd.f32 0.0, %v874
  %v876 = vpop.f32.mrb[0].mxu0
  %v877 = vadd.f32 0.0, %v876
  %878 = vdwg.mxu0
  %v879 = vadd.f32 %v622, %v801
  %v880 = vadd.f32 %v626, %v803
  %v881 = vadd.f32 %v622, %v805
  %v882 = vadd.f32 %v626, %v807
  %v883 = vadd.f32 %v622, %v811
  %v884 = vadd.f32 %v626, %v813
  %v885 = vadd.f32 %v622, %v815
  %v886 = vadd.f32 %v626, %v817
  %v887 = vadd.f32 %v622, %v821
  %v888 = vadd.f32 %v626, %v823
  %v889 = vadd.f32 %v622, %v825
  %v890 = vadd.f32 %v626, %v827
  %v891 = vadd.f32 %v622, %v831
  %v892 = vadd.f32 %v626, %v833
  %v893 = vadd.f32 %v622, %v835
  %v894 = vadd.f32 %v626, %v837
  %v895 = vadd.f32 %v622, %v841
  %v896 = vadd.f32 %v626, %v843
  %v897 = vadd.f32 %v622, %v845
  %v898 = vadd.f32 %v626, %v847
  %v899 = vadd.f32 %v622, %v851
  %v900 = vadd.f32 %v626, %v853
  %v901 = vadd.f32 %v622, %v855
  %v902 = vadd.f32 %v626, %v857
  %v903 = vadd.f32 %v622, %v861
  %v904 = vadd.f32 %v626, %v863
  %v905 = vadd.f32 %v622, %v865
  %v906 = vadd.f32 %v626, %v867
  %v907 = vadd.f32 %v622, %v871
  %v908 = vadd.f32 %v626, %v873
  %v909 = vadd.f32 %v622, %v875
  %v910 = vadd.f32 %v626, %v877
  %s911 = scalar_lea.vmem %s3, 96
  %v912 = vld [vmem:[%s911] sm:$0xff]
  %v913 = vld [vmem:[%s911 + $0x8] sm:$0xff]
  %v914 = vld [vmem:[%s911 + $0x10] sm:$0xff]
  %v915 = vld [vmem:[%s911 + $0x18] sm:$0xff]
  %v916 = vld [vmem:[%s911 + $0x20] sm:$0xff]
  %v917 = vld [vmem:[%s911 + $0x28] sm:$0xff]
  %v918 = vld [vmem:[%s911 + $0x30] sm:$0xff]
  %v919 = vld [vmem:[%s911 + $0x38] sm:$0xff]
  %v920 = vld [vmem:[%s911 + $0x40] sm:$0xff]
  %v921 = vld [vmem:[%s911 + $0x48] sm:$0xff]
  %v922 = vld [vmem:[%s911 + $0x50] sm:$0xff]
  %v923 = vld [vmem:[%s911 + $0x58] sm:$0xff]
  %v926 = vunpack.c.l.b16 %v605
  %v927 = vunpack.c.l.b16 %v615
  %v928 = vpack.c.b16 %v659, %v658
  %v929 = vpack.c.b16 %v661, %v660
  %v930 = vpack.c.b16 %v663, %v662
  %v931 = vpack.c.b16 %v926, %v664
  %v932 = vpack.c.b16 %v667, %v666
  %v933 = vpack.c.b16 %v669, %v668
  %v934 = vpack.c.b16 %v671, %v670
  %v935 = vpack.c.b16 %v927, %v672
  %v948 = vunpack.c.l.b16 %v912
  %v949 = vunpack.c.h.b16 %v912
  %v950 = vunpack.c.l.b16 %v913
  %v951 = vunpack.c.h.b16 %v913
  %v952 = vunpack.c.l.b16 %v914
  %v953 = vunpack.c.h.b16 %v914
  %v954 = vunpack.c.l.b16 %v915
  %v955 = vunpack.c.h.b16 %v915
  %v956 = vunpack.c.l.b16 %v916
  %v957 = vunpack.c.h.b16 %v916
  %v958 = vunpack.c.l.b16 %v917
  %v959 = vunpack.c.h.b16 %v917
  %v960 = vunpack.c.l.b16 %v918
  %v961 = vunpack.c.h.b16 %v918
  %v962 = vunpack.c.l.b16 %v919
  %v963 = vunpack.c.h.b16 %v919
  %v964 = vunpack.c.l.b16 %v920
  %v965 = vunpack.c.h.b16 %v920
  %v966 = vunpack.c.l.b16 %v921
  %v967 = vunpack.c.h.b16 %v921
  %v968 = vunpack.c.l.b16 %v922
  %v969 = vunpack.c.h.b16 %v922
  %v970 = vunpack.c.l.b16 %v923
  %v971 = vunpack.c.h.b16 %v923
  %v972 = vpack.c.b16 %v950, %v948
  %v973 = vpack.c.b16 %v951, %v949
  %v974 = vpack.c.b16 %v954, %v952
  %v975 = vpack.c.b16 %v955, %v953
  %v976 = vpack.c.b16 %v958, %v956
  %v977 = vpack.c.b16 %v959, %v957
  %v978 = vpack.c.b16 %v962, %v960
  %v979 = vpack.c.b16 %v963, %v961
  %v980 = vpack.c.b16 %v966, %v964
  %v981 = vpack.c.b16 %v967, %v965
  %v982 = vpack.c.b16 %v970, %v968
  %v983 = vpack.c.b16 %v971, %v969
  %v997 = vsel %vm741, %v928, 0
  %v1000 = vsel %vm741, %v929, 0
  %v1003 = vsel %vm741, %v930, 0
  %v1006 = vsel %vm741, %v931, 0
  %v1009 = vsel %vm741, %v932, 0
  %v1012 = vsel %vm741, %v933, 0
  %v1015 = vsel %vm741, %v934, 0
  %v1018 = vsel %vm741, %v935, 0
  %1020 = vmatprep.subr.bf16.mxu0 %v973
  %1021 = vmatpush1.bf16.msra.mxu0 %v972
  %1022 = vmatprep.subr.bf16.mxu0 %v975
  %1023 = vmatpush1.bf16.msra.mxu0 %v974
  %1024 = vmatprep.subr.bf16.mxu0 %v977
  %1025 = vmatpush1.bf16.msra.mxu0 %v976
  %1026 = vmatprep.subr.bf16.mxu0 %v979
  %1027 = vmatpush1.bf16.msra.mxu0 %v978
  %1028 = vmatprep.subr.bf16.mxu0 %v981
  %1029 = vmatpush1.bf16.msra.mxu0 %v980
  %1030 = vmatprep.subr.bf16.mxu0 %v983
  %1031 = vmatpush1.bf16.msra.mxu0 %v982
  %1032 = vmatprep.subr.bf16.mxu0 0
  %1033 = vmatpush1.bf16.msra.mxu0 0
  %1034 = vmatprep.subr.bf16.mxu0 0
  %1035 = vmatpush1.bf16.msra.mxu0 0
  %1036 = vmatprep.subr.bf16.mxu0 0
  %1037 = vmatpush1.bf16.msra.mxu0 0
  %1038 = vmatprep.subr.bf16.mxu0 0
  %1039 = vmatpush1.bf16.msra.mxu0 0
  %1040 = vmatprep.subr.bf16.mxu0 0
  %1041 = vmatpush1.bf16.msra.mxu0 0
  %1042 = vmatprep.subr.bf16.mxu0 0
  %1043 = vmatpush1.bf16.msra.mxu0 0
  %1044 = vmatprep.subr.bf16.mxu0 0
  %1045 = vmatpush1.bf16.msra.mxu0 0
  %1046 = vmatprep.subr.bf16.mxu0 0
  %1047 = vmatpush1.bf16.msra.mxu0 0
  %1048 = vmatprep.subr.bf16.mxu0 0
  %1049 = vmatpush1.bf16.msra.mxu0 0
  %1050 = vmatprep.subr.bf16.mxu0 0
  %1051 = vmatpush1.bf16.msra.mxu0 0
  %1052 = vmatprep.mubr.bf16.mxu0 0
  %1053 = vmatmul.mubr.bf16.gmra.mrb[0].mxu0 %v997
  %v1054 = vpop.f32.mrb[0].mxu0
  %v1055 = vadd.f32 0.0, %v1054
  %v1056 = vpop.f32.mrb[0].mxu0
  %v1057 = vadd.f32 0.0, %v1056
  %v1058 = vpop.f32.mrb[0].mxu0
  %v1059 = vadd.f32 0.0, %v1058
  %v1060 = vpop.f32.mrb[0].mxu0
  %v1061 = vadd.f32 0.0, %v1060
  %1062 = vmatprep.mubr.bf16.mxu0 0
  %1063 = vmatmul.mubr.bf16.gmra.mrb[0].mxu0 %v1000
  %v1064 = vpop.f32.mrb[0].mxu0
  %v1065 = vadd.f32 0.0, %v1064
  %v1066 = vpop.f32.mrb[0].mxu0
  %v1067 = vadd.f32 0.0, %v1066
  %v1068 = vpop.f32.mrb[0].mxu0
  %v1069 = vadd.f32 0.0, %v1068
  %v1070 = vpop.f32.mrb[0].mxu0
  %v1071 = vadd.f32 0.0, %v1070
  %1072 = vmatprep.mubr.bf16.mxu0 0
  %1073 = vmatmul.mubr.bf16.gmra.mrb[0].mxu0 %v1003
  %v1074 = vpop.f32.mrb[0].mxu0
  %v1075 = vadd.f32 0.0, %v1074
  %v1076 = vpop.f32.mrb[0].mxu0
  %v1077 = vadd.f32 0.0, %v1076
  %v1078 = vpop.f32.mrb[0].mxu0
  %v1079 = vadd.f32 0.0, %v1078
  %v1080 = vpop.f32.mrb[0].mxu0
  %v1081 = vadd.f32 0.0, %v1080
  %1082 = vmatprep.mubr.bf16.mxu0 0
  %1083 = vmatmul.mubr.bf16.gmra.mrb[0].mxu0 %v1006
  %v1084 = vpop.f32.mrb[0].mxu0
  %v1085 = vadd.f32 0.0, %v1084
  %v1086 = vpop.f32.mrb[0].mxu0
  %v1087 = vadd.f32 0.0, %v1086
  %v1088 = vpop.f32.mrb[0].mxu0
  %v1089 = vadd.f32 0.0, %v1088
  %v1090 = vpop.f32.mrb[0].mxu0
  %v1091 = vadd.f32 0.0, %v1090
  %1092 = vmatprep.mubr.bf16.mxu0 0
  %1093 = vmatmul.mubr.bf16.gmra.mrb[0].mxu0 %v1009
  %v1094 = vpop.f32.mrb[0].mxu0
  %v1095 = vadd.f32 0.0, %v1094
  %v1096 = vpop.f32.mrb[0].mxu0
  %v1097 = vadd.f32 0.0, %v1096
  %v1098 = vpop.f32.mrb[0].mxu0
  %v1099 = vadd.f32 0.0, %v1098
  %v1100 = vpop.f32.mrb[0].mxu0
  %v1101 = vadd.f32 0.0, %v1100
  %1102 = vmatprep.mubr.bf16.mxu0 0
  %1103 = vmatmul.mubr.bf16.gmra.mrb[0].mxu0 %v1012
  %v1104 = vpop.f32.mrb[0].mxu0
  %v1105 = vadd.f32 0.0, %v1104
  %v1106 = vpop.f32.mrb[0].mxu0
  %v1107 = vadd.f32 0.0, %v1106
  %v1108 = vpop.f32.mrb[0].mxu0
  %v1109 = vadd.f32 0.0, %v1108
  %v1110 = vpop.f32.mrb[0].mxu0
  %v1111 = vadd.f32 0.0, %v1110
  %1112 = vmatprep.mubr.bf16.mxu0 0
  %1113 = vmatmul.mubr.bf16.gmra.mrb[0].mxu0 %v1015
  %v1114 = vpop.f32.mrb[0].mxu0
  %v1115 = vadd.f32 0.0, %v1114
  %v1116 = vpop.f32.mrb[0].mxu0
  %v1117 = vadd.f32 0.0, %v1116
  %v1118 = vpop.f32.mrb[0].mxu0
  %v1119 = vadd.f32 0.0, %v1118
  %v1120 = vpop.f32.mrb[0].mxu0
  %v1121 = vadd.f32 0.0, %v1120
  %1122 = vmatprep.mubr.bf16.mxu0 0
  %1123 = vmatmul.mubr.bf16.gmra.mrb[0].mxu0 %v1018
  %v1124 = vpop.f32.mrb[0].mxu0
  %v1125 = vadd.f32 0.0, %v1124
  %v1126 = vpop.f32.mrb[0].mxu0
  %v1127 = vadd.f32 0.0, %v1126
  %v1128 = vpop.f32.mrb[0].mxu0
  %v1129 = vadd.f32 0.0, %v1128
  %v1130 = vpop.f32.mrb[0].mxu0
  %v1131 = vadd.f32 0.0, %v1130
  %1132 = vdwg.mxu0
  %v1133 = vadd.f32 %v879, %v1055
  %v1134 = vadd.f32 %v880, %v1057
  %v1135 = vadd.f32 %v881, %v1059
  %v1136 = vadd.f32 %v882, %v1061
  %v1137 = vadd.f32 %v883, %v1065
  %v1138 = vadd.f32 %v884, %v1067
  %v1139 = vadd.f32 %v885, %v1069
  %v1140 = vadd.f32 %v886, %v1071
  %v1141 = vadd.f32 %v887, %v1075
  %v1142 = vadd.f32 %v888, %v1077
  %v1143 = vadd.f32 %v889, %v1079
  %v1144 = vadd.f32 %v890, %v1081
  %v1145 = vadd.f32 %v891, %v1085
  %v1146 = vadd.f32 %v892, %v1087
  %v1147 = vadd.f32 %v893, %v1089
  %v1148 = vadd.f32 %v894, %v1091
  %v1149 = vadd.f32 %v895, %v1095
  %v1150 = vadd.f32 %v896, %v1097
  %v1151 = vadd.f32 %v897, %v1099
  %v1152 = vadd.f32 %v898, %v1101
  %v1153 = vadd.f32 %v899, %v1105
  %v1154 = vadd.f32 %v900, %v1107
  %v1155 = vadd.f32 %v901, %v1109
  %v1156 = vadd.f32 %v902, %v1111
  %v1157 = vadd.f32 %v903, %v1115
  %v1158 = vadd.f32 %v904, %v1117
  %v1159 = vadd.f32 %v905, %v1119
  %v1160 = vadd.f32 %v906, %v1121
  %v1161 = vadd.f32 %v907, %v1125
  %v1162 = vadd.f32 %v908, %v1127
  %v1163 = vadd.f32 %v909, %v1129
  %v1164 = vadd.f32 %v910, %v1131
  %s1165 = scalar_lea.vmem %s3, 192
  %v1166 = vld [vmem:[%s1165] sm:$0xff]
  %v1167 = vld [vmem:[%s1165 + $0x8] sm:$0xff]
  %v1168 = vld [vmem:[%s1165 + $0x10] sm:$0xff]
  %v1169 = vld [vmem:[%s1165 + $0x18] sm:$0xff]
  %v1170 = vld [vmem:[%s1165 + $0x20] sm:$0xff]
  %v1171 = vld [vmem:[%s1165 + $0x28] sm:$0xff]
  %v1172 = vld [vmem:[%s1165 + $0x30] sm:$0xff]
  %v1173 = vld [vmem:[%s1165 + $0x38] sm:$0xff]
  %v1174 = vld [vmem:[%s1165 + $0x40] sm:$0xff]
  %v1175 = vld [vmem:[%s1165 + $0x48] sm:$0xff]
  %v1176 = vld [vmem:[%s1165 + $0x50] sm:$0xff]
  %v1177 = vld [vmem:[%s1165 + $0x58] sm:$0xff]
  %v1180 = vunpack.c.l.b16 %v606
  %v1181 = vunpack.c.l.b16 %v616
  %v1182 = vpack.c.b16 %v1180, %v926
  %v1183 = vpack.c.b16 %v1181, %v927
  %v1196 = vunpack.c.l.b16 %v1166
  %v1197 = vunpack.c.h.b16 %v1166
  %v1198 = vunpack.c.l.b16 %v1167
  %v1199 = vunpack.c.h.b16 %v1167
  %v1200 = vunpack.c.l.b16 %v1168
  %v1201 = vunpack.c.h.b16 %v1168
  %v1202 = vunpack.c.l.b16 %v1169
  %v1203 = vunpack.c.h.b16 %v1169
  %v1204 = vunpack.c.l.b16 %v1170
  %v1205 = vunpack.c.h.b16 %v1170
  %v1206 = vunpack.c.l.b16 %v1171
  %v1207 = vunpack.c.h.b16 %v1171
  %v1208 = vunpack.c.l.b16 %v1172
  %v1209 = vunpack.c.h.b16 %v1172
  %v1210 = vunpack.c.l.b16 %v1173
  %v1211 = vunpack.c.h.b16 %v1173
  %v1212 = vunpack.c.l.b16 %v1174
  %v1213 = vunpack.c.h.b16 %v1174
  %v1214 = vunpack.c.l.b16 %v1175
  %v1215 = vunpack.c.h.b16 %v1175
  %v1216 = vunpack.c.l.b16 %v1176
  %v1217 = vunpack.c.h.b16 %v1176
  %v1218 = vunpack.c.l.b16 %v1177
  %v1219 = vunpack.c.h.b16 %v1177
  %v1220 = vpack.c.b16 %v1198, %v1196
  %v1221 = vpack.c.b16 %v1199, %v1197
  %v1222 = vpack.c.b16 %v1202, %v1200
  %v1223 = vpack.c.b16 %v1203, %v1201
  %v1224 = vpack.c.b16 %v1206, %v1204
  %v1225 = vpack.c.b16 %v1207, %v1205
  %v1226 = vpack.c.b16 %v1210, %v1208
  %v1227 = vpack.c.b16 %v1211, %v1209
  %v1228 = vpack.c.b16 %v1214, %v1212
  %v1229 = vpack.c.b16 %v1215, %v1213
  %v1230 = vpack.c.b16 %v1218, %v1216
  %v1231 = vpack.c.b16 %v1219, %v1217
  %v1245 = vsel %vm741, %v1182, 0
  %v1248 = vsel %vm741, %v1183, 0
  %1250 = vmatprep.subr.bf16.mxu0 %v1221
  %1251 = vmatpush1.bf16.msra.mxu0 %v1220
  %1252 = vmatprep.subr.bf16.mxu0 %v1223
  %1253 = vmatpush1.bf16.msra.mxu0 %v1222
  %1254 = vmatprep.subr.bf16.mxu0 %v1225
  %1255 = vmatpush1.bf16.msra.mxu0 %v1224
  %1256 = vmatprep.subr.bf16.mxu0 %v1227
  %1257 = vmatpush1.bf16.msra.mxu0 %v1226
  %1258 = vmatprep.subr.bf16.mxu0 %v1229
  %1259 = vmatpush1.bf16.msra.mxu0 %v1228
  %1260 = vmatprep.subr.bf16.mxu0 %v1231
  %1261 = vmatpush1.bf16.msra.mxu0 %v1230
  %1262 = vmatprep.subr.bf16.mxu0 0
  %1263 = vmatpush1.bf16.msra.mxu0 0
  %1264 = vmatprep.subr.bf16.mxu0 0
  %1265 = vmatpush1.bf16.msra.mxu0 0
  %1266 = vmatprep.subr.bf16.mxu0 0
  %1267 = vmatpush1.bf16.msra.mxu0 0
  %1268 = vmatprep.subr.bf16.mxu0 0
  %1269 = vmatpush1.bf16.msra.mxu0 0
  %1270 = vmatprep.subr.bf16.mxu0 0
  %1271 = vmatpush1.bf16.msra.mxu0 0
  %1272 = vmatprep.subr.bf16.mxu0 0
  %1273 = vmatpush1.bf16.msra.mxu0 0
  %1274 = vmatprep.subr.bf16.mxu0 0
  %1275 = vmatpush1.bf16.msra.mxu0 0
  %1276 = vmatprep.subr.bf16.mxu0 0
  %1277 = vmatpush1.bf16.msra.mxu0 0
  %1278 = vmatprep.subr.bf16.mxu0 0
  %1279 = vmatpush1.bf16.msra.mxu0 0
  %1280 = vmatprep.subr.bf16.mxu0 0
  %1281 = vmatpush1.bf16.msra.mxu0 0
  %1282 = vmatprep.mubr.bf16.mxu0 0
  %1283 = vmatmul.mubr.bf16.gmra.mrb[0].mxu0 %v746
  %v1284 = vpop.f32.mrb[0].mxu0
  %v1285 = vadd.f32 0.0, %v1284
  %v1286 = vpop.f32.mrb[0].mxu0
  %v1287 = vadd.f32 0.0, %v1286
  %v1288 = vpop.f32.mrb[0].mxu0
  %v1289 = vadd.f32 0.0, %v1288
  %v1290 = vpop.f32.mrb[0].mxu0
  %v1291 = vadd.f32 0.0, %v1290
  %1292 = vmatprep.mubr.bf16.mxu0 0
  %1293 = vmatmul.mubr.bf16.gmra.mrb[0].mxu0 %v749
  %v1294 = vpop.f32.mrb[0].mxu0
  %v1295 = vadd.f32 0.0, %v1294
  %v1296 = vpop.f32.mrb[0].mxu0
  %v1297 = vadd.f32 0.0, %v1296
  %v1298 = vpop.f32.mrb[0].mxu0
  %v1299 = vadd.f32 0.0, %v1298
  %v1300 = vpop.f32.mrb[0].mxu0
  %v1301 = vadd.f32 0.0, %v1300
  %1302 = vmatprep.mubr.bf16.mxu0 0
  %1303 = vmatmul.mubr.bf16.gmra.mrb[0].mxu0 %v752
  %v1304 = vpop.f32.mrb[0].mxu0
  %v1305 = vadd.f32 0.0, %v1304
  %v1306 = vpop.f32.mrb[0].mxu0
  %v1307 = vadd.f32 0.0, %v1306
  %v1308 = vpop.f32.mrb[0].mxu0
  %v1309 = vadd.f32 0.0, %v1308
  %v1310 = vpop.f32.mrb[0].mxu0
  %v1311 = vadd.f32 0.0, %v1310
  %1312 = vmatprep.mubr.bf16.mxu0 0
  %1313 = vmatmul.mubr.bf16.gmra.mrb[0].mxu0 %v1245
  %v1314 = vpop.f32.mrb[0].mxu0
  %v1315 = vadd.f32 0.0, %v1314
  %v1316 = vpop.f32.mrb[0].mxu0
  %v1317 = vadd.f32 0.0, %v1316
  %v1318 = vpop.f32.mrb[0].mxu0
  %v1319 = vadd.f32 0.0, %v1318
  %v1320 = vpop.f32.mrb[0].mxu0
  %v1321 = vadd.f32 0.0, %v1320
  %1322 = vmatprep.mubr.bf16.mxu0 0
  %1323 = vmatmul.mubr.bf16.gmra.mrb[0].mxu0 %v758
  %v1324 = vpop.f32.mrb[0].mxu0
  %v1325 = vadd.f32 0.0, %v1324
  %v1326 = vpop.f32.mrb[0].mxu0
  %v1327 = vadd.f32 0.0, %v1326
  %v1328 = vpop.f32.mrb[0].mxu0
  %v1329 = vadd.f32 0.0, %v1328
  %v1330 = vpop.f32.mrb[0].mxu0
  %v1331 = vadd.f32 0.0, %v1330
  %1332 = vmatprep.mubr.bf16.mxu0 0
  %1333 = vmatmul.mubr.bf16.gmra.mrb[0].mxu0 %v761
  %v1334 = vpop.f32.mrb[0].mxu0
  %v1335 = vadd.f32 0.0, %v1334
  %v1336 = vpop.f32.mrb[0].mxu0
  %v1337 = vadd.f32 0.0, %v1336
  %v1338 = vpop.f32.mrb[0].mxu0
  %v1339 = vadd.f32 0.0, %v1338
  %v1340 = vpop.f32.mrb[0].mxu0
  %v1341 = vadd.f32 0.0, %v1340
  %1342 = vmatprep.mubr.bf16.mxu0 0
  %1343 = vmatmul.mubr.bf16.gmra.mrb[0].mxu0 %v764
  %v1344 = vpop.f32.mrb[0].mxu0
  %v1345 = vadd.f32 0.0, %v1344
  %v1346 = vpop.f32.mrb[0].mxu0
  %v1347 = vadd.f32 0.0, %v1346
  %v1348 = vpop.f32.mrb[0].mxu0
  %v1349 = vadd.f32 0.0, %v1348
  %v1350 = vpop.f32.mrb[0].mxu0
  %v1351 = vadd.f32 0.0, %v1350
  %1352 = vmatprep.mubr.bf16.mxu0 0
  %1353 = vmatmul.mubr.bf16.gmra.mrb[0].mxu0 %v1248
  %v1354 = vpop.f32.mrb[0].mxu0
  %v1355 = vadd.f32 0.0, %v1354
  %v1356 = vpop.f32.mrb[0].mxu0
  %v1357 = vadd.f32 0.0, %v1356
  %v1358 = vpop.f32.mrb[0].mxu0
  %v1359 = vadd.f32 0.0, %v1358
  %v1360 = vpop.f32.mrb[0].mxu0
  %v1361 = vadd.f32 0.0, %v1360
  %1362 = vdwg.mxu0
  %v1363 = vadd.f32 %v1133, %v1285
  %v1364 = vadd.f32 %v1134, %v1287
  %v1365 = vadd.f32 %v1135, %v1289
  %v1366 = vadd.f32 %v1136, %v1291
  %v1367 = vadd.f32 %v1137, %v1295
  %v1368 = vadd.f32 %v1138, %v1297
  %v1369 = vadd.f32 %v1139, %v1299
  %v1370 = vadd.f32 %v1140, %v1301
  %v1371 = vadd.f32 %v1141, %v1305
  %v1372 = vadd.f32 %v1142, %v1307
  %v1373 = vadd.f32 %v1143, %v1309
  %v1374 = vadd.f32 %v1144, %v1311
  %v1375 = vadd.f32 %v1145, %v1315
  %v1376 = vadd.f32 %v1146, %v1317
  %v1377 = vadd.f32 %v1147, %v1319
  %v1378 = vadd.f32 %v1148, %v1321
  %v1379 = vadd.f32 %v1149, %v1325
  %v1380 = vadd.f32 %v1150, %v1327
  %v1381 = vadd.f32 %v1151, %v1329
  %v1382 = vadd.f32 %v1152, %v1331
  %v1383 = vadd.f32 %v1153, %v1335
  %v1384 = vadd.f32 %v1154, %v1337
  %v1385 = vadd.f32 %v1155, %v1339
  %v1386 = vadd.f32 %v1156, %v1341
  %v1387 = vadd.f32 %v1157, %v1345
  %v1388 = vadd.f32 %v1158, %v1347
  %v1389 = vadd.f32 %v1159, %v1349
  %v1390 = vadd.f32 %v1160, %v1351
  %v1391 = vadd.f32 %v1161, %v1355
  %v1392 = vadd.f32 %v1162, %v1357
  %v1393 = vadd.f32 %v1163, %v1359
  %v1394 = vadd.f32 %v1164, %v1361
  %v1395 = vmax.f32 %v1363, 0.0
  %v1396 = vmax.f32 %v1364, 0.0
  %v1397 = vmax.f32 %v1365, 0.0
  %v1398 = vmax.f32 %v1366, 0.0
  %v1399 = vmax.f32 %v1367, 0.0
  %v1400 = vmax.f32 %v1368, 0.0
  %v1401 = vmax.f32 %v1369, 0.0
  %v1402 = vmax.f32 %v1370, 0.0
  %v1403 = vmax.f32 %v1371, 0.0
  %v1404 = vmax.f32 %v1372, 0.0
  %v1405 = vmax.f32 %v1373, 0.0
  %v1406 = vmax.f32 %v1374, 0.0
  %v1407 = vmax.f32 %v1375, 0.0
  %v1408 = vmax.f32 %v1376, 0.0
  %v1409 = vmax.f32 %v1377, 0.0
  %v1410 = vmax.f32 %v1378, 0.0
  %v1411 = vmax.f32 %v1379, 0.0
  %v1412 = vmax.f32 %v1380, 0.0
  %v1413 = vmax.f32 %v1381, 0.0
  %v1414 = vmax.f32 %v1382, 0.0
  %v1415 = vmax.f32 %v1383, 0.0
  %v1416 = vmax.f32 %v1384, 0.0
  %v1417 = vmax.f32 %v1385, 0.0
  %v1418 = vmax.f32 %v1386, 0.0
  %v1419 = vmax.f32 %v1387, 0.0
  %v1420 = vmax.f32 %v1388, 0.0
  %v1421 = vmax.f32 %v1389, 0.0
  %v1422 = vmax.f32 %v1390, 0.0
  %v1423 = vmax.f32 %v1391, 0.0
  %v1424 = vmax.f32 %v1392, 0.0
  %v1425 = vmax.f32 %v1393, 0.0
  %v1426 = vmax.f32 %v1394, 0.0
  %v1427 = vadd.f32 %v1395, %v1397
  %v1428 = vadd.f32 %v1427, %v1399
  %v1429 = vadd.f32 %v1428, %v1401
  %v1430 = vadd.f32 %v1429, %v1403
  %v1431 = vadd.f32 %v1430, %v1405
  %v1432 = vadd.f32 %v1431, %v1407
  %v1433 = vadd.f32 %v1432, %v1409
  %v1434 = vrot.slane %v1433, 4
  %v1435 = vadd.f32 %v1433, %v1434
  %v1436 = vrot.slane %v1435, 2
  %v1437 = vadd.f32 %v1435, %v1436
  %v1438 = vrot.slane %v1437, 1
  %v1439 = vadd.f32 %v1437, %v1438
  %v1440 = vadd.f32 %v1396, %v1398
  %v1441 = vadd.f32 %v1440, %v1400
  %v1442 = vadd.f32 %v1441, %v1402
  %v1443 = vadd.f32 %v1442, %v1404
  %v1444 = vadd.f32 %v1443, %v1406
  %v1445 = vadd.f32 %v1444, %v1408
  %v1446 = vadd.f32 %v1445, %v1410
  %v1447 = vrot.slane %v1446, 4
  %v1448 = vadd.f32 %v1446, %v1447
  %v1449 = vrot.slane %v1448, 2
  %v1450 = vadd.f32 %v1448, %v1449
  %v1451 = vrot.slane %v1450, 1
  %v1452 = vadd.f32 %v1450, %v1451
  %v1453 = vadd.f32 %v1411, %v1413
  %v1454 = vadd.f32 %v1453, %v1415
  %v1455 = vadd.f32 %v1454, %v1417
  %v1456 = vadd.f32 %v1455, %v1419
  %v1457 = vadd.f32 %v1456, %v1421
  %v1458 = vadd.f32 %v1457, %v1423
  %v1459 = vadd.f32 %v1458, %v1425
  %v1460 = vrot.slane %v1459, 4
  %v1461 = vadd.f32 %v1459, %v1460
  %v1462 = vrot.slane %v1461, 2
  %v1463 = vadd.f32 %v1461, %v1462
  %v1464 = vrot.slane %v1463, 1
  %v1465 = vadd.f32 %v1463, %v1464
  %v1466 = vadd.f32 %v1412, %v1414
  %v1467 = vadd.f32 %v1466, %v1416
  %v1468 = vadd.f32 %v1467, %v1418
  %v1469 = vadd.f32 %v1468, %v1420
  %v1470 = vadd.f32 %v1469, %v1422
  %v1471 = vadd.f32 %v1470, %v1424
  %v1472 = vadd.f32 %v1471, %v1426
  %v1473 = vrot.slane %v1472, 4
  %v1474 = vadd.f32 %v1472, %v1473
  %v1475 = vrot.slane %v1474, 2
  %v1476 = vadd.f32 %v1474, %v1475
  %v1477 = vrot.slane %v1476, 1
  %v1478 = vadd.f32 %v1476, %v1477
  %v1479 = vpack.c.bf16 %v1439, %v1439
  %v1480 = vpack.c.bf16 %v1452, %v1452
  %v1481 = vpack.c.bf16 %v1465, %v1465
  %v1482 = vpack.c.bf16 %v1478, %v1478
  %v1483 = vld [vmem:[%s5] sm:$0xf]
  %v1484 = vld [vmem:[%s5 + $0x4] sm:$0xf]
  %v1485 = vld [vmem:[%s5 + $0x8] sm:$0xf]
  %v1486 = vld [vmem:[%s5 + $0xc] sm:$0xf]
  %v1487 = vld [vmem:[%s5 + $0x10] sm:$0xf]
  %v1488 = vld [vmem:[%s5 + $0x14] sm:$0xf]
  %v1489 = vld [vmem:[%s5 + $0x18] sm:$0xf]
  %v1490 = vld [vmem:[%s5 + $0x1c] sm:$0xf]
  %v1491 = vld [vmem:[%s5 + $0x20] sm:$0xf]
  %v1492 = vld [vmem:[%s5 + $0x24] sm:$0xf]
  %v1493 = vld [vmem:[%s5 + $0x28] sm:$0xf]
  %v1494 = vld [vmem:[%s5 + $0x2c] sm:$0xf]
  %v1495 = vld [vmem:[%s5 + $0x30] sm:$0xf]
  %v1496 = vld [vmem:[%s5 + $0x34] sm:$0xf]
  %v1497 = vld [vmem:[%s5 + $0x38] sm:$0xf]
  %v1498 = vld [vmem:[%s5 + $0x3c] sm:$0xf]
  %v1499 = vld [vmem:[%s5 + $0x40] sm:$0xf]
  %v1500 = vld [vmem:[%s5 + $0x44] sm:$0xf]
  %v1501 = vld [vmem:[%s5 + $0x48] sm:$0xf]
  %v1502 = vld [vmem:[%s5 + $0x4c] sm:$0xf]
  %v1503 = vld [vmem:[%s5 + $0x50] sm:$0xf]
  %v1504 = vld [vmem:[%s5 + $0x54] sm:$0xf]
  %v1505 = vld [vmem:[%s5 + $0x58] sm:$0xf]
  %v1506 = vld [vmem:[%s5 + $0x5c] sm:$0xf]
  %v1507 = vld [vmem:[%s5 + $0x60] sm:$0xf]
  %v1508 = vld [vmem:[%s5 + $0x64] sm:$0xf]
  %v1509 = vld [vmem:[%s5 + $0x68] sm:$0xf]
  %v1510 = vld [vmem:[%s5 + $0x6c] sm:$0xf]
  %v1511 = vld [vmem:[%s5 + $0x70] sm:$0xf]
  %v1512 = vld [vmem:[%s5 + $0x74] sm:$0xf]
  %v1513 = vld [vmem:[%s5 + $0x78] sm:$0xf]
  %v1514 = vld [vmem:[%s5 + $0x7c] sm:$0xf]
  %v1515 = vld [vmem:[%s6] sm:$0x1]
  %v1517 = vlaneseq
  %v1518 = vshrl.u32 %v1517, 7
  %v1519 = vsub.s32 0, %v1518
  %v1520 = vrot.slane %v1515, %v1519
  %v1526 = vunpack.c.l.b16 %v1479
  %v1527 = vunpack.c.l.b16 %v1480
  %v1528 = vunpack.c.l.b16 %v1481
  %v1529 = vunpack.c.l.b16 %v1482
  %vm1530 = vcmask 1041409
  %v1531 = vsel %vm1530, %v1528, %v1526
  %v1532 = vsel %vm1530, %v1529, %v1527
  %v1533 = vpack.c.b16 %v1531, %v1531
  %v1534 = vpack.c.b16 %v1532, %v1532
  %v1569 = vunpack.c.l.b16 %v1483
  %v1570 = vunpack.c.l.b16 %v1484
  %v1571 = vunpack.c.l.b16 %v1485
  %v1572 = vunpack.c.l.b16 %v1486
  %v1573 = vunpack.c.l.b16 %v1487
  %v1574 = vunpack.c.l.b16 %v1488
  %v1575 = vunpack.c.l.b16 %v1489
  %v1576 = vunpack.c.l.b16 %v1490
  %v1577 = vunpack.c.l.b16 %v1491
  %v1578 = vunpack.c.l.b16 %v1492
  %v1579 = vunpack.c.l.b16 %v1493
  %v1580 = vunpack.c.l.b16 %v1494
  %v1581 = vunpack.c.l.b16 %v1495
  %v1582 = vunpack.c.l.b16 %v1496
  %v1583 = vunpack.c.l.b16 %v1497
  %v1584 = vunpack.c.l.b16 %v1498
  %v1585 = vunpack.c.l.b16 %v1499
  %v1586 = vunpack.c.l.b16 %v1500
  %v1587 = vunpack.c.l.b16 %v1501
  %v1588 = vunpack.c.l.b16 %v1502
  %v1589 = vunpack.c.l.b16 %v1503
  %v1590 = vunpack.c.l.b16 %v1504
  %v1591 = vunpack.c.l.b16 %v1505
  %v1592 = vunpack.c.l.b16 %v1506
  %v1593 = vunpack.c.l.b16 %v1507
  %v1594 = vunpack.c.l.b16 %v1508
  %v1595 = vunpack.c.l.b16 %v1509
  %v1596 = vunpack.c.l.b16 %v1510
  %v1597 = vunpack.c.l.b16 %v1511
  %v1598 = vunpack.c.l.b16 %v1512
  %v1599 = vunpack.c.l.b16 %v1513
  %v1600 = vunpack.c.l.b16 %v1514
  %v1601 = vpack.c.b16 %v1570, %v1569
  %v1602 = vpack.c.b16 %v1572, %v1571
  %v1603 = vpack.c.b16 %v1574, %v1573
  %v1604 = vpack.c.b16 %v1576, %v1575
  %v1605 = vpack.c.b16 %v1578, %v1577
  %v1606 = vpack.c.b16 %v1580, %v1579
  %v1607 = vpack.c.b16 %v1582, %v1581
  %v1608 = vpack.c.b16 %v1584, %v1583
  %v1609 = vpack.c.b16 %v1586, %v1585
  %v1610 = vpack.c.b16 %v1588, %v1587
  %v1611 = vpack.c.b16 %v1590, %v1589
  %v1612 = vpack.c.b16 %v1592, %v1591
  %v1613 = vpack.c.b16 %v1594, %v1593
  %v1614 = vpack.c.b16 %v1596, %v1595
  %v1615 = vpack.c.b16 %v1598, %v1597
  %v1616 = vpack.c.b16 %v1600, %v1599
  %1633 = vmatprep.subr.bf16.mxu0 0
  %1634 = vmatpush1.bf16.msra.mxu0 %v1601
  %1635 = vmatprep.subr.bf16.mxu0 0
  %1636 = vmatpush1.bf16.msra.mxu0 %v1602
  %1637 = vmatprep.subr.bf16.mxu0 0
  %1638 = vmatpush1.bf16.msra.mxu0 %v1603
  %1639 = vmatprep.subr.bf16.mxu0 0
  %1640 = vmatpush1.bf16.msra.mxu0 %v1604
  %1641 = vmatprep.subr.bf16.mxu0 0
  %1642 = vmatpush1.bf16.msra.mxu0 %v1605
  %1643 = vmatprep.subr.bf16.mxu0 0
  %1644 = vmatpush1.bf16.msra.mxu0 %v1606
  %1645 = vmatprep.subr.bf16.mxu0 0
  %1646 = vmatpush1.bf16.msra.mxu0 %v1607
  %1647 = vmatprep.subr.bf16.mxu0 0
  %1648 = vmatpush1.bf16.msra.mxu0 %v1608
  %1649 = vmatprep.subr.bf16.mxu0 0
  %1650 = vmatpush1.bf16.msra.mxu0 %v1609
  %1651 = vmatprep.subr.bf16.mxu0 0
  %1652 = vmatpush1.bf16.msra.mxu0 %v1610
  %1653 = vmatprep.subr.bf16.mxu0 0
  %1654 = vmatpush1.bf16.msra.mxu0 %v1611
  %1655 = vmatprep.subr.bf16.mxu0 0
  %1656 = vmatpush1.bf16.msra.mxu0 %v1612
  %1657 = vmatprep.subr.bf16.mxu0 0
  %1658 = vmatpush1.bf16.msra.mxu0 %v1613
  %1659 = vmatprep.subr.bf16.mxu0 0
  %1660 = vmatpush1.bf16.msra.mxu0 %v1614
  %1661 = vmatprep.subr.bf16.mxu0 0
  %1662 = vmatpush1.bf16.msra.mxu0 %v1615
  %1663 = vmatprep.subr.bf16.mxu0 0
  %1664 = vmatpush1.bf16.msra.mxu0 %v1616
  %1665 = vmatprep.mubr.bf16.mxu0 %v1534
  %1666 = vmatmul.mubr.bf16.gmra.mrb[0].mxu0 %v1533
  %v1667 = vpop.f32.mrb[0].mxu0
  %v1668 = vadd.f32 %v1520, %v1667
  %v1669 = vpop.f32.mrb[0].mxu0
  %v1670 = vpop.f32.mrb[0].mxu0
  %v1671 = vpop.f32.mrb[0].mxu0
  %1672 = vdwg.mxu0
  %v1673 = vlaneseq
  %v1674 = vand.u32 %v1673, 127
  %vm1675 = vcmp.lt.s32.totalorder %v1674, 10
  %v1676 = vsel %vm1675, %v1668, -1e+30
  %vm1677 = vcmask 1041408
  %v1678 = vsel %vm1677, %v1676, -inf
  %1679 = vmax.xlane.f32.xlu0 %v1678
  %v1680 = vpop.xlane.xlu0 %1679
  %v1681 = vsub.f32 %v1676, %v1680
  %v1682 = vmul.f32 %v1681, 1.442695
  %v1683 = vpow.pop %v1682
  %v1684 = vsel %vm1677, %v1683, 0.0
  %1685 = vadd.xlane.f32.xlu0 %v1684
  %v1686 = vpop.xlane.xlu0 %1685
  %v1687 = vrcp.pop %v1686
  %vm1688 = vcmp.eq.f32.partialorder %v1676, %v1680
  %v1689 = vsel %vm1688, %v1674, 128
  %v1690 = vsel %vm1677, %v1689, 2147483647
  %v1691 = vand.u32 %v1690, 65535
  %v1692 = vshra.s32 %v1690, 16
  %v1693 = vcvt.s32.f32 %v1691
  %v1694 = vcvt.s32.f32 %v1692
  %1695 = vmin.xlane.f32.xlu0 %v1694
  %v1696 = vpop.xlane.xlu0 %1695
  %vm1697 = vcmp.eq.f32.partialorder %v1694, %v1696
  %v1698 = vsel %vm1697, %v1693, inf
  %1699 = vmin.xlane.f32.xlu0 %v1698
  %v1700 = vpop.xlane.xlu0 %1699
  %v1701 = vcvt.f32.s32 %v1700
  %v1702 = vcvt.f32.s32 %v1696
  %v1703 = vshll.u32 %v1702, 16
  %v1704 = vadd.s32 %v1703, %v1701
  %v1706 = vlaneseq
  %v1707 = vshrl.u32 %v1706, 7
  %v1708 = vsub.s32 0, %v1707
  %v1709 = vrot.slane %v1687, %v1708
  %v1710 = vlaneseq
  %v1711 = vshrl.u32 %v1710, 7
  %v1712 = vsub.s32 1, %v1711
  %v1713 = vrot.slane %v1687, %v1712
  %1716 = vst [vmem:[%s7] sm:$0x1] %v1709
  %1717 = vst [vmem:[%s7 + $0x1] sm:$0x1] %v1713
  %v1718 = vlaneseq
  %v1719 = vshrl.u32 %v1718, 7
  %v1720 = vsub.s32 0, %v1719
  %v1721 = vrot.slane %v1704, %v1720
  %v1722 = vlaneseq
  %v1723 = vshrl.u32 %v1722, 7
  %v1724 = vsub.s32 1, %v1723
  %v1725 = vrot.slane %v1704, %v1724
  %1726 = vst [vmem:[%s8] sm:$0x1] %v1721
  %1727 = vst [vmem:[%s8 + $0x1] sm:$0x1] %v1725
  // Predicated region
  $region30: #{classification_net_forward.1} parent=0 // pred_check
    _
  $region31: #{classification_net_forward.1} parent=0 // pred_check_branch
    %1729 = sbr.rel (0) target = $region33
  $region32: #{classification_net_forward.1} parent=0 // pred_region
    _
  $region33: #{classification_net_forward.1} parent=0 // pred_fallthru
    _
  // Predicated region
  $region34: #{classification_net_forward.1} parent=0 // pred_check
    _
  $region35: #{classification_net_forward.1} parent=0 // pred_check_branch
    %1731 = sbr.rel (0) target = $region37
  $region36: #{classification_net_forward.1} parent=0 // pred_region
    _
  $region37: #{classification_net_forward.1} parent=0 // pred_fallthru
    _
  // Predicated region
  $region38: #{classification_net_forward.1} parent=0 // pred_check
    _
  $region39: #{classification_net_forward.1} parent=0 // pred_check_branch
    %1733 = sbr.rel (0) target = $region41
  $region40: #{classification_net_forward.1} parent=0 // pred_region
    _
  $region41: #{classification_net_forward.1} parent=0 // pred_fallthru
    _
  // Predicated region
  $region42: #{classification_net_forward.1} parent=0 // pred_check
    _
  $region43: #{classification_net_forward.1} parent=0 // pred_check_branch
    %1735 = sbr.rel (0) target = $region45
  $region44: #{classification_net_forward.1} parent=0 // pred_region
    _
  $region45: #{classification_net_forward.1} parent=0 // pred_fallthru
    _

</llo_original>
